<compile_context>
chip_gen: v7x
topology: tpu7x:2x2x1
jax: 0.10.0
libtpu: 0.0.40
codegen_flags: <defaults>
</compile_context>

<pallas_src>
import functools

import jax
import jax.numpy as jnp
from jax.experimental import pallas as pl
from jax.experimental.pallas import tpu as pltpu

DIMS = [784, 512, 256, 128, 64, 10]
OUT_PAD = 128    # layer-4 and layer-5 outputs padded to one full lane tile

# MACs per row through the (padded) network and resident parameter bytes,
# used for the pl.CostEstimate.
_LAYER_MACS = (DIMS[0] * DIMS[1] + DIMS[1] * DIMS[2] + DIMS[2] * DIMS[3]
               + DIMS[3] * OUT_PAD + OUT_PAD * OUT_PAD)          # 598016
_PARAM_BYTES = (2 * _LAYER_MACS                                   # bf16 weights
                + 4 * (DIMS[1] + DIMS[2] + DIMS[3] + OUT_PAD + OUT_PAD))  # f32 biases


def mlp_kernel(x_ref,
               w1, b1, w2, b2, w3, b3, w4, b4, w5, b5,
               o_ref):
    """One batch tile through all 5 layers. bf16 MXU inputs, f32 accumulate."""
    # f32 -> bf16 cast happens here (in-register), not as a separate XLA pass.
    x = x_ref[...].astype(jnp.bfloat16)
    # layer1: 784 -> 512, ReLU
    h = jnp.dot(x, w1[...], preferred_element_type=jnp.float32) + b1[...]
    h = jnp.maximum(h, 0.0)
    # layer2: 512 -> 256, ReLU
    h = jnp.dot(h.astype(jnp.bfloat16), w2[...],
                preferred_element_type=jnp.float32) + b2[...]
    h = jnp.maximum(h, 0.0)
    # layer3: 256 -> 128, ReLU
    h = jnp.dot(h.astype(jnp.bfloat16), w3[...],
                preferred_element_type=jnp.float32) + b3[...]
    h = jnp.maximum(h, 0.0)
    # layer4: 128 -> 128 (cols 64..127 zero-padded), ReLU
    h = jnp.dot(h.astype(jnp.bfloat16), w4[...],
                preferred_element_type=jnp.float32) + b4[...]
    h = jnp.maximum(h, 0.0)
    # layer5: 128 -> 128 (only first 10 lanes meaningful), no activation
    out = jnp.dot(h.astype(jnp.bfloat16), w5[...],
                  preferred_element_type=jnp.float32) + b5[...]
    o_ref[...] = out.astype(o_ref.dtype)   # bf16, lane-dense store


def _round_up(x, m):
    return (x + m - 1) // m * m


def _pick_tile_b(b_pad):
    """Largest MXU-friendly tile that divides b_pad, preferring >=2 grid steps
    (so v7x's two TensorCores both get work via dimension_semantics)."""
    candidates = (512, 256, 128, 64, 32, 16, 8)
    for t in candidates:
        if b_pad % t == 0 and b_pad // t >= 2:
            return t
    for t in candidates:
        if b_pad % t == 0:
            return t
    return 8


@functools.partial(jax.jit, static_argnames=("tile_b",))
def _net_forward_jit(x, flat_params, *, tile_b):
    """Whole forward path in one jit: reshape, batch pad, kernel, slice, cast."""
    x2d = x.reshape(-1, DIMS[0]).astype(jnp.float32)
    B = x2d.shape[0]
    B_pad = _round_up(max(B, 1), 8)
    if B_pad != B:
        x2d = jnp.pad(x2d, ((0, B_pad - B), (0, 0)))

    grid = (B_pad // tile_b,)

    # Input block: full last dim (784 == array dim, so the (8,128) rule is
    # satisfied without any K padding / extra HBM pass).
    in_specs = [pl.BlockSpec((tile_b, DIMS[0]), lambda i: (i, 0))]
    for p in flat_params:
        # constant index_map -> weight/bias block stays resident across steps
        in_specs.append(pl.BlockSpec(p.shape, lambda i: (0, 0)))

    flops = 2 * B_pad * _LAYER_MACS
    bytes_accessed = (B_pad * DIMS[0] * 4          # f32 input read
                      + _PARAM_BYTES               # resident params (read once)
                      + B_pad * OUT_PAD * 2)       # bf16 output write

    out = pl.pallas_call(
        mlp_kernel,
        grid=grid,
        out_shape=jax.ShapeDtypeStruct((B_pad, OUT_PAD), jnp.bfloat16),
        in_specs=in_specs,
        out_specs=pl.BlockSpec((tile_b, OUT_PAD), lambda i: (i, 0)),
        compiler_params=pltpu.CompilerParams(
            dimension_semantics=("parallel",)),
        cost_estimate=pl.CostEstimate(flops=flops, transcendentals=0,
                                      bytes_accessed=bytes_accessed),
    )(x2d, *flat_params)

    # Tiny fused epilogue: drop padded rows / lanes, return f32.
    return out[:B, :DIMS[-1]].astype(jnp.float32)


def net_forward(x, kernel_params):
    """x: any shape whose total elements are a multiple of 784 (e.g. (B,1,28,28))."""
    B = x.size // DIMS[0]
    B_pad = _round_up(max(B, 1), 8)
    tile_b = _pick_tile_b(B_pad)
    return _net_forward_jit(x, tuple(kernel_params), tile_b=tile_b)


def init_params(key):
    """PyTorch-style init U(-1/sqrt(fan_in), 1/sqrt(fan_in)).

    Weights stored as (in_features, out_features); biases as (1, out_features).
    """
    params = []
    for i in range(len(DIMS) - 1):
        fan_in, fan_out = DIMS[i], DIMS[i + 1]
        key, kw, kb = jax.random.split(key, 3)
        bound = 1.0 / jnp.sqrt(jnp.float32(fan_in))
        w = jax.random.uniform(kw, (fan_in, fan_out), jnp.float32,
                               minval=-bound, maxval=bound)
        b = jax.random.uniform(kb, (1, fan_out), jnp.float32,
                               minval=-bound, maxval=bound)
        params.append((w, b))
    return params


def prepare_kernel_params(params):
    """Pad layers 4/5 to lane-friendly widths, cast weights to bf16 (biases f32)."""
    (w1, b1), (w2, b2), (w3, b3), (w4, b4), (w5, b5) = params
    # layer4: pad out 64 -> 128 with zero cols / zero bias (ReLU keeps them 0)
    w4p = jnp.zeros((w4.shape[0], OUT_PAD), jnp.float32).at[:, :w4.shape[1]].set(w4)
    b4p = jnp.zeros((1, OUT_PAD), jnp.float32).at[:, :b4.shape[1]].set(b4)
    # layer5: pad in 64 -> 128 (zero rows) and out 10 -> 128 (zero cols / bias)
    w5p = jnp.zeros((OUT_PAD, OUT_PAD), jnp.float32)
    w5p = w5p.at[:w5.shape[0], :w5.shape[1]].set(w5)
    b5p = jnp.zeros((1, OUT_PAD), jnp.float32).at[:, :b5.shape[1]].set(b5)

    return [
        w1.astype(jnp.bfloat16), b1,
        w2.astype(jnp.bfloat16), b2,
        w3.astype(jnp.bfloat16), b3,
        w4p.astype(jnp.bfloat16), b4p,
        w5p.astype(jnp.bfloat16), b5p,
    ]


def reference_forward(x, params):
    """Plain-JAX reference using the same bf16 quantization points as the kernel
    (bf16 weights/activations, f32 accumulate, bf16 output store)."""
    h = x.reshape(-1, DIMS[0]).astype(jnp.float32)
    n = len(params)
    for i, (w, b) in enumerate(params):
        hq = h.astype(jnp.bfloat16).astype(jnp.float32)
        wq = w.astype(jnp.bfloat16).astype(jnp.float32)
        h = hq @ wq + b
        if i < n - 1:
            h = jnp.maximum(h, 0.0)
    return h.astype(jnp.bfloat16).astype(jnp.float32)


if __name__ == "__main__":
    key = jax.random.PRNGKey(0)
    key, kx = jax.random.split(key)

    # Small MNIST-like batch: (B=8, C=1, H=28, W=28) -> flattened to (8, 784).
    x = jax.random.normal(kx, (8, 1, 28, 28), dtype=jnp.float32)
    params = init_params(key)
    kernel_params = prepare_kernel_params(params)

    out = net_forward(x, kernel_params)
    out = jax.block_until_ready(out)

    ref = reference_forward(x, params)
    assert out.shape == (8, 10), out.shape
    # Both sides use bf16 weights/activations and a bf16 output store; the only
    # remaining difference is MXU accumulation order (+ possible 1-ULP rounding
    # flips at the final bf16 cast), covered by rtol=5e-3.
    assert jnp.allclose(out, ref, atol=2e-3, rtol=5e-3), "mismatch vs reference"

    print("KERNEL_OK")
</pallas_src>

<mosaic_0001>
module attributes {stable_mosaic.version = 11 : i64} {
  func.func @mlp_kernel(%arg0: i32, %arg1: memref<8x784xf32, #tpu.memory_space<vmem>>, %arg2: memref<784x512xbf16, #tpu.memory_space<vmem>>, %arg3: memref<1x512xf32, #tpu.memory_space<vmem>>, %arg4: memref<512x256xbf16, #tpu.memory_space<vmem>>, %arg5: memref<1x256xf32, #tpu.memory_space<vmem>>, %arg6: memref<256x128xbf16, #tpu.memory_space<vmem>>, %arg7: memref<1x128xf32, #tpu.memory_space<vmem>>, %arg8: memref<128x128xbf16, #tpu.memory_space<vmem>>, %arg9: memref<1x128xf32, #tpu.memory_space<vmem>>, %arg10: memref<128x128xbf16, #tpu.memory_space<vmem>>, %arg11: memref<1x128xf32, #tpu.memory_space<vmem>>, %arg12: memref<8x128xbf16, #tpu.memory_space<vmem>>) attributes {dimension_semantics = [#tpu.dimension_semantics<parallel>], iteration_bounds = array<i64: 1>, scalar_prefetch = 0 : i64, scratch_operands = 0 : i64, tpu.core_type = #tpu.core_type<tc>, window_params = [{transform_indices = @transform_0, window_bounds = array<i64: 8, 784>}, {pipeline_mode = #tpu.pipeline_mode<synchronous>, transform_indices = @transform_1, window_bounds = array<i64: 784, 512>}, {pipeline_mode = #tpu.pipeline_mode<synchronous>, transform_indices = @transform_2, window_bounds = array<i64: 1, 512>}, {pipeline_mode = #tpu.pipeline_mode<synchronous>, transform_indices = @transform_3, window_bounds = array<i64: 512, 256>}, {pipeline_mode = #tpu.pipeline_mode<synchronous>, transform_indices = @transform_4, window_bounds = array<i64: 1, 256>}, {pipeline_mode = #tpu.pipeline_mode<synchronous>, transform_indices = @transform_5, window_bounds = array<i64: 256, 128>}, {pipeline_mode = #tpu.pipeline_mode<synchronous>, transform_indices = @transform_6, window_bounds = array<i64: 1, 128>}, {pipeline_mode = #tpu.pipeline_mode<synchronous>, transform_indices = @transform_7, window_bounds = array<i64: 128, 128>}, {pipeline_mode = #tpu.pipeline_mode<synchronous>, transform_indices = @transform_8, window_bounds = array<i64: 1, 128>}, {pipeline_mode = #tpu.pipeline_mode<synchronous>, transform_indices = @transform_9, window_bounds = array<i64: 128, 128>}, {pipeline_mode = #tpu.pipeline_mode<synchronous>, transform_indices = @transform_10, window_bounds = array<i64: 1, 128>}, {transform_indices = @transform_11, window_bounds = array<i64: 8, 128>}]} {
    %c0 = arith.constant 0 : index
    %c0_0 = arith.constant 0 : index
    %0 = vector.load %arg1[%c0, %c0_0] : memref<8x784xf32, #tpu.memory_space<vmem>>, vector<8x784xf32>
    %1 = arith.truncf %0 : vector<8x784xf32> to vector<8x784xbf16>
    %c0_1 = arith.constant 0 : index
    %c0_2 = arith.constant 0 : index
    %2 = vector.load %arg2[%c0_1, %c0_2] : memref<784x512xbf16, #tpu.memory_space<vmem>>, vector<784x512xbf16>
    %cst = arith.constant dense<0.000000e+00> : vector<8x512xf32>
    %3 = tpu.matmul %1, %2, %cst {dimension_numbers = #tpu.dot_dimension_numbers<[1], [0], [0], [1], [0, 0, 1, 1], [], []>} : vector<8x784xbf16>, vector<784x512xbf16>, vector<8x512xf32> -> vector<8x512xf32>
    %c0_3 = arith.constant 0 : index
    %c0_4 = arith.constant 0 : index
    %4 = vector.load %arg3[%c0_3, %c0_4] : memref<1x512xf32, #tpu.memory_space<vmem>>, vector<1x512xf32>
    %5 = vector.broadcast %4 : vector<1x512xf32> to vector<8x512xf32>
    %6 = arith.addf %3, %5 : vector<8x512xf32>
    %cst_5 = arith.constant 0.000000e+00 : f32
    %7 = vector.broadcast %cst_5 : f32 to vector<8x512xf32>
    %8 = arith.maximumf %6, %7 : vector<8x512xf32>
    %9 = arith.truncf %8 : vector<8x512xf32> to vector<8x512xbf16>
    %c0_6 = arith.constant 0 : index
    %c0_7 = arith.constant 0 : index
    %10 = vector.load %arg4[%c0_6, %c0_7] : memref<512x256xbf16, #tpu.memory_space<vmem>>, vector<512x256xbf16>
    %cst_8 = arith.constant dense<0.000000e+00> : vector<8x256xf32>
    %11 = tpu.matmul %9, %10, %cst_8 {dimension_numbers = #tpu.dot_dimension_numbers<[1], [0], [0], [1], [0, 0, 1, 1], [], []>} : vector<8x512xbf16>, vector<512x256xbf16>, vector<8x256xf32> -> vector<8x256xf32>
    %c0_9 = arith.constant 0 : index
    %c0_10 = arith.constant 0 : index
    %12 = vector.load %arg5[%c0_9, %c0_10] : memref<1x256xf32, #tpu.memory_space<vmem>>, vector<1x256xf32>
    %13 = vector.broadcast %12 : vector<1x256xf32> to vector<8x256xf32>
    %14 = arith.addf %11, %13 : vector<8x256xf32>
    %cst_11 = arith.constant 0.000000e+00 : f32
    %15 = vector.broadcast %cst_11 : f32 to vector<8x256xf32>
    %16 = arith.maximumf %14, %15 : vector<8x256xf32>
    %17 = arith.truncf %16 : vector<8x256xf32> to vector<8x256xbf16>
    %c0_12 = arith.constant 0 : index
    %c0_13 = arith.constant 0 : index
    %18 = vector.load %arg6[%c0_12, %c0_13] : memref<256x128xbf16, #tpu.memory_space<vmem>>, vector<256x128xbf16>
    %cst_14 = arith.constant dense<0.000000e+00> : vector<8x128xf32>
    %19 = tpu.matmul %17, %18, %cst_14 {dimension_numbers = #tpu.dot_dimension_numbers<[1], [0], [0], [1], [0, 0, 1, 1], [], []>} : vector<8x256xbf16>, vector<256x128xbf16>, vector<8x128xf32> -> vector<8x128xf32>
    %c0_15 = arith.constant 0 : index
    %c0_16 = arith.constant 0 : index
    %20 = vector.load %arg7[%c0_15, %c0_16] : memref<1x128xf32, #tpu.memory_space<vmem>>, vector<1x128xf32>
    %21 = vector.broadcast %20 : vector<1x128xf32> to vector<8x128xf32>
    %22 = arith.addf %19, %21 : vector<8x128xf32>
    %cst_17 = arith.constant 0.000000e+00 : f32
    %23 = vector.broadcast %cst_17 : f32 to vector<8x128xf32>
    %24 = arith.maximumf %22, %23 : vector<8x128xf32>
    %25 = arith.truncf %24 : vector<8x128xf32> to vector<8x128xbf16>
    %c0_18 = arith.constant 0 : index
    %c0_19 = arith.constant 0 : index
    %26 = vector.load %arg8[%c0_18, %c0_19] : memref<128x128xbf16, #tpu.memory_space<vmem>>, vector<128x128xbf16>
    %cst_20 = arith.constant dense<0.000000e+00> : vector<8x128xf32>
    %27 = tpu.matmul %25, %26, %cst_20 {dimension_numbers = #tpu.dot_dimension_numbers<[1], [0], [0], [1], [0, 0, 1, 1], [], []>} : vector<8x128xbf16>, vector<128x128xbf16>, vector<8x128xf32> -> vector<8x128xf32>
    %c0_21 = arith.constant 0 : index
    %c0_22 = arith.constant 0 : index
    %28 = vector.load %arg9[%c0_21, %c0_22] : memref<1x128xf32, #tpu.memory_space<vmem>>, vector<1x128xf32>
    %29 = vector.broadcast %28 : vector<1x128xf32> to vector<8x128xf32>
    %30 = arith.addf %27, %29 : vector<8x128xf32>
    %cst_23 = arith.constant 0.000000e+00 : f32
    %31 = vector.broadcast %cst_23 : f32 to vector<8x128xf32>
    %32 = arith.maximumf %30, %31 : vector<8x128xf32>
    %33 = arith.truncf %32 : vector<8x128xf32> to vector<8x128xbf16>
    %c0_24 = arith.constant 0 : index
    %c0_25 = arith.constant 0 : index
    %34 = vector.load %arg10[%c0_24, %c0_25] : memref<128x128xbf16, #tpu.memory_space<vmem>>, vector<128x128xbf16>
    %cst_26 = arith.constant dense<0.000000e+00> : vector<8x128xf32>
    %35 = tpu.matmul %33, %34, %cst_26 {dimension_numbers = #tpu.dot_dimension_numbers<[1], [0], [0], [1], [0, 0, 1, 1], [], []>} : vector<8x128xbf16>, vector<128x128xbf16>, vector<8x128xf32> -> vector<8x128xf32>
    %c0_27 = arith.constant 0 : index
    %c0_28 = arith.constant 0 : index
    %36 = vector.load %arg11[%c0_27, %c0_28] : memref<1x128xf32, #tpu.memory_space<vmem>>, vector<1x128xf32>
    %37 = vector.broadcast %36 : vector<1x128xf32> to vector<8x128xf32>
    %38 = arith.addf %35, %37 : vector<8x128xf32>
    %39 = arith.truncf %38 : vector<8x128xf32> to vector<8x128xbf16>
    %c0_29 = arith.constant 0 : index
    %c0_30 = arith.constant 0 : index
    %40 = vector.load %arg12[%c0_29, %c0_30] : memref<8x128xbf16, #tpu.memory_space<vmem>>, vector<8x128xbf16>
    tpu.vector_store %arg12[%c0_29, %c0_30], %39 {strides = array<i32>} : memref<8x128xbf16, #tpu.memory_space<vmem>>, vector<8x128xbf16>,
    return
  }
  func.func @transform_0(%arg0: i32) -> (i32, i32) {
    %c0_i32 = arith.constant 0 : i32
    %c0_i32_0 = arith.constant 0 : i32
    return %arg0, %c0_i32 : i32, i32
  }
  func.func @transform_1(%arg0: i32) -> (i32, i32) {
    %c0_i32 = arith.constant 0 : i32
    %c0_i32_0 = arith.constant 0 : i32
    %c0_i32_1 = arith.constant 0 : i32
    return %c0_i32, %c0_i32_0 : i32, i32
  }
  func.func @transform_2(%arg0: i32) -> (i32, i32) {
    %c0_i32 = arith.constant 0 : i32
    %c0_i32_0 = arith.constant 0 : i32
    %c0_i32_1 = arith.constant 0 : i32
    return %c0_i32, %c0_i32_0 : i32, i32
  }
  func.func @transform_3(%arg0: i32) -> (i32, i32) {
    %c0_i32 = arith.constant 0 : i32
    %c0_i32_0 = arith.constant 0 : i32
    %c0_i32_1 = arith.constant 0 : i32
    return %c0_i32, %c0_i32_0 : i32, i32
  }
  func.func @transform_4(%arg0: i32) -> (i32, i32) {
    %c0_i32 = arith.constant 0 : i32
    %c0_i32_0 = arith.constant 0 : i32
    %c0_i32_1 = arith.constant 0 : i32
    return %c0_i32, %c0_i32_0 : i32, i32
  }
  func.func @transform_5(%arg0: i32) -> (i32, i32) {
    %c0_i32 = arith.constant 0 : i32
    %c0_i32_0 = arith.constant 0 : i32
    %c0_i32_1 = arith.constant 0 : i32
    return %c0_i32, %c0_i32_0 : i32, i32
  }
  func.func @transform_6(%arg0: i32) -> (i32, i32) {
    %c0_i32 = arith.constant 0 : i32
    %c0_i32_0 = arith.constant 0 : i32
    %c0_i32_1 = arith.constant 0 : i32
    return %c0_i32, %c0_i32_0 : i32, i32
  }
  func.func @transform_7(%arg0: i32) -> (i32, i32) {
    %c0_i32 = arith.constant 0 : i32
    %c0_i32_0 = arith.constant 0 : i32
    %c0_i32_1 = arith.constant 0 : i32
    return %c0_i32, %c0_i32_0 : i32, i32
  }
  func.func @transform_8(%arg0: i32) -> (i32, i32) {
    %c0_i32 = arith.constant 0 : i32
    %c0_i32_0 = arith.constant 0 : i32
    %c0_i32_1 = arith.constant 0 : i32
    return %c0_i32, %c0_i32_0 : i32, i32
  }
  func.func @transform_9(%arg0: i32) -> (i32, i32) {
    %c0_i32 = arith.constant 0 : i32
    %c0_i32_0 = arith.constant 0 : i32
    %c0_i32_1 = arith.constant 0 : i32
    return %c0_i32, %c0_i32_0 : i32, i32
  }
  func.func @transform_10(%arg0: i32) -> (i32, i32) {
    %c0_i32 = arith.constant 0 : i32
    %c0_i32_0 = arith.constant 0 : i32
    %c0_i32_1 = arith.constant 0 : i32
    return %c0_i32, %c0_i32_0 : i32, i32
  }
  func.func @transform_11(%arg0: i32) -> (i32, i32) {
    %c0_i32 = arith.constant 0 : i32
    %c0_i32_0 = arith.constant 0 : i32
    return %arg0, %c0_i32 : i32, i32
  }
}

</mosaic_0001>

<llo_original>
// kernel: _net_forward_jit.1
$region0: #{_net_forward_jit.1}
  #allocation0 [shape = 'u32[]', space=smem, size = 0x4, offset = 0x4, fixed_abs, tag = 'smem constant byte address 0x4 - core index']
  #allocation1 [shape = 'u32[144,128]{1,0:T(1,128)}', space=vmem, size = 0x12000, scoped, tag = 'internal scratch']
  %s0 = inlined_call_operand.vmem [shape: f32[8,784], index: 0, kind: input, shape index: {}]
  %s1 = inlined_call_operand.hbm [shape: bf16[784,512], index: 1, kind: input, shape index: {}]
  %s2 = inlined_call_operand.vmem [shape: f32[1,512], index: 2, kind: input, shape index: {}]
  %s3 = inlined_call_operand.vmem [shape: bf16[512,256], index: 3, kind: input, shape index: {}]
  %s4 = inlined_call_operand.vmem [shape: f32[1,256], index: 4, kind: input, shape index: {}]
  %s5 = inlined_call_operand.vmem [shape: bf16[256,128], index: 5, kind: input, shape index: {}]
  %s6 = inlined_call_operand.vmem [shape: f32[1,128], index: 6, kind: input, shape index: {}]
  %s7 = inlined_call_operand.vmem [shape: bf16[128,128], index: 7, kind: input, shape index: {}]
  %s8 = inlined_call_operand.vmem [shape: f32[1,128], index: 8, kind: input, shape index: {}]
  %s9 = inlined_call_operand.vmem [shape: bf16[128,128], index: 9, kind: input, shape index: {}]
  %s10 = inlined_call_operand.vmem [shape: f32[1,128], index: 10, kind: input, shape index: {}]
  %s11 = inlined_call_operand.vmem [shape: bf16[8,128], index: 11, kind: output, shape index: {}]
  %s12 = sld [smem:[#allocation0]]
  $region58: #{_net_forward_jit.1} parent=0
    _
  %s14 = ssub.s32 1, %s12
  %s15 = scalar_select 0, %s14, %s12
  $region1: #{_net_forward_jit.1} parent=0
    #allocation2 [shape = 'u8[802816]{0}', space=vmem, size = 0xc4000, scoped, tag = 'input window, operand 1, single buffered']
    #allocation3 [shape = 's32[1]{0}', space=sflag, size = 0x4, scoped, tag = 'scoped memory for _net_forward_jit.1']
    %16 = vsyncpa [#allocation3], 0
    // Predicated region
    $region2: #{_net_forward_jit.1} parent=1 // pred_check
      _
    $region3: #{_net_forward_jit.1} parent=1 // pred_check_branch
      %18 = sbr.rel (0) target = $region5
    $region4: #{_net_forward_jit.1} parent=1 // pred_region
      _
    $region5: #{_net_forward_jit.1} parent=1 // pred_fallthru
      _
    // Predicated region
    $region6: #{_net_forward_jit.1} parent=1 // pred_check
      _
    $region7: #{_net_forward_jit.1} parent=1 // pred_check_branch
      %20 = sbr.rel (0) target = $region9
    $region8: #{_net_forward_jit.1} parent=1 // pred_region
      %s22 = ssub.s32 25088, 25088
      %23 = vsyncadd [#allocation3], %s22
      %s24 = sshll.u32 [#allocation2], 4
      %s25 = int_to_ptr.vmem [resolvable:$true] %s24
      %30 = dma.hbm_to_vmem [thread:$0]  %s1, 25088, %s25, [#allocation3], 256, 256, 16
    $region9: #{_net_forward_jit.1} parent=1 // pred_fallthru
      _
    // Predicated region
    $region10: #{_net_forward_jit.1} parent=1 // pred_check
      _
    $region11: #{_net_forward_jit.1} parent=1 // pred_check_branch
      %32 = sbr.rel (0) target = $region13
    $region12: #{_net_forward_jit.1} parent=1 // pred_region
      _
    $region13: #{_net_forward_jit.1} parent=1 // pred_fallthru
      _
    // Predicated region
    $region14: #{_net_forward_jit.1} parent=1 // pred_check
      _
    $region15: #{_net_forward_jit.1} parent=1 // pred_check_branch
      %34 = sbr.rel (0) target = $region17
    $region16: #{_net_forward_jit.1} parent=1 // pred_region
      _
    $region17: #{_net_forward_jit.1} parent=1 // pred_fallthru
      _
    // Predicated region
    $region18: #{_net_forward_jit.1} parent=1 // pred_check
      _
    $region19: #{_net_forward_jit.1} parent=1 // pred_check_branch
      %36 = sbr.rel (0) target = $region21
    $region20: #{_net_forward_jit.1} parent=1 // pred_region
      _
    $region21: #{_net_forward_jit.1} parent=1 // pred_fallthru
      _
    // Predicated region
    $region22: #{_net_forward_jit.1} parent=1 // pred_check
      _
    $region23: #{_net_forward_jit.1} parent=1 // pred_check_branch
      %38 = sbr.rel (0) target = $region25
    $region24: #{_net_forward_jit.1} parent=1 // pred_region
      _
    $region25: #{_net_forward_jit.1} parent=1 // pred_fallthru
      _
    // Predicated region
    $region26: #{_net_forward_jit.1} parent=1 // pred_check
      _
    $region27: #{_net_forward_jit.1} parent=1 // pred_check_branch
      %40 = sbr.rel (0) target = $region29
    $region28: #{_net_forward_jit.1} parent=1 // pred_region
      _
    $region29: #{_net_forward_jit.1} parent=1 // pred_fallthru
      _
    // Predicated region
    $region30: #{_net_forward_jit.1} parent=1 // pred_check
      _
    $region31: #{_net_forward_jit.1} parent=1 // pred_check_branch
      %42 = sbr.rel (0) target = $region33
    $region32: #{_net_forward_jit.1} parent=1 // pred_region
      _
    $region33: #{_net_forward_jit.1} parent=1 // pred_fallthru
      _
    // Predicated region
    $region34: #{_net_forward_jit.1} parent=1 // pred_check
      _
    $region35: #{_net_forward_jit.1} parent=1 // pred_check_branch
      %44 = sbr.rel (0) target = $region37
    $region36: #{_net_forward_jit.1} parent=1 // pred_region
      _
    $region37: #{_net_forward_jit.1} parent=1 // pred_fallthru
      _
    // Predicated region
    $region38: #{_net_forward_jit.1} parent=1 // pred_check
      _
    $region39: #{_net_forward_jit.1} parent=1 // pred_check_branch
      %46 = sbr.rel (0) target = $region41
    $region40: #{_net_forward_jit.1} parent=1 // pred_region
      _
    $region41: #{_net_forward_jit.1} parent=1 // pred_fallthru
      _
    // Predicated region
    $region42: #{_net_forward_jit.1} parent=1 // pred_check
      _
    $region43: #{_net_forward_jit.1} parent=1 // pred_check_branch
      %48 = sbr.rel (0) target = $region45
    $region44: #{_net_forward_jit.1} parent=1 // pred_region
      _
    $region45: #{_net_forward_jit.1} parent=1 // pred_fallthru
      _
    // Predicated region
    $region46: #{_net_forward_jit.1} parent=1 // pred_check
      _
    $region47: #{_net_forward_jit.1} parent=1 // pred_check_branch
      %50 = sbr.rel (0) target = $region49
    $region48: #{_net_forward_jit.1} parent=1 // pred_region
      %51 = dma.done [#allocation3], 25088
    $region49: #{_net_forward_jit.1} parent=1 // pred_fallthru
      _
    %v53 = vld [vmem:[%s0] sm:$0xff]
    %v54 = vld [vmem:[%s0 + $0x8] sm:$0xff]
    %v55 = vld [vmem:[%s0 + $0x10] sm:$0xff]
    %v56 = vld [vmem:[%s0 + $0x18] sm:$0xff]
    %v57 = vld [vmem:[%s0 + $0x20] sm:$0xff]
    %v58 = vld [vmem:[%s0 + $0x28] sm:$0xff]
    %v59 = vld [vmem:[%s0 + $0x30] sm:$0xff]
    %v60 = vpack.c.bf16 %v53, %v53
    %v61 = vpack.c.bf16 %v54, %v54
    %v62 = vpack.c.bf16 %v55, %v55
    %v63 = vpack.c.bf16 %v56, %v56
    %v64 = vpack.c.bf16 %v57, %v57
    %v65 = vpack.c.bf16 %v58, %v58
    %v66 = vpack.c.bf16 %v59, %v59
    %v67 = vld [vmem:[#allocation2] sm:$0xff]
    %v68 = vld [vmem:[#allocation2 + $0x8] sm:$0xff]
    %v69 = vld [vmem:[#allocation2 + $0x10] sm:$0xff]
    %v70 = vld [vmem:[#allocation2 + $0x18] sm:$0xff]
    %v71 = vld [vmem:[#allocation2 + $0x20] sm:$0xff]
    %v72 = vld [vmem:[#allocation2 + $0x28] sm:$0xff]
    %v73 = vld [vmem:[#allocation2 + $0x30] sm:$0xff]
    %v74 = vld [vmem:[#allocation2 + $0x38] sm:$0xff]
    %v75 = vld [vmem:[#allocation2 + $0x40] sm:$0xff]
    %v76 = vld [vmem:[#allocation2 + $0x48] sm:$0xff]
    %v77 = vld [vmem:[#allocation2 + $0x50] sm:$0xff]
    %v78 = vld [vmem:[#allocation2 + $0x58] sm:$0xff]
    %v79 = vld [vmem:[#allocation2 + $0x60] sm:$0xff]
    %v80 = vld [vmem:[#allocation2 + $0x68] sm:$0xff]
    %v81 = vld [vmem:[#allocation2 + $0x70] sm:$0xff]
    %v82 = vld [vmem:[#allocation2 + $0x78] sm:$0xff]
    %v83 = vld [vmem:[#allocation2 + $0x80] sm:$0xff]
    %v84 = vld [vmem:[#allocation2 + $0x88] sm:$0xff]
    %v85 = vld [vmem:[#allocation2 + $0x90] sm:$0xff]
    %v86 = vld [vmem:[#allocation2 + $0x98] sm:$0xff]
    %v87 = vld [vmem:[#allocation2 + $0xa0] sm:$0xff]
    %v88 = vld [vmem:[#allocation2 + $0xa8] sm:$0xff]
    %v89 = vld [vmem:[#allocation2 + $0xb0] sm:$0xff]
    %v90 = vld [vmem:[#allocation2 + $0xb8] sm:$0xff]
    %v91 = vld [vmem:[#allocation2 + $0xc0] sm:$0xff]
    %v92 = vld [vmem:[#allocation2 + $0xc8] sm:$0xff]
    %v93 = vld [vmem:[#allocation2 + $0xd0] sm:$0xff]
    %v94 = vld [vmem:[#allocation2 + $0xd8] sm:$0xff]
    %v95 = vld [vmem:[#allocation2 + $0xe0] sm:$0xff]
    %v96 = vld [vmem:[#allocation2 + $0xe8] sm:$0xff]
    %v97 = vld [vmem:[#allocation2 + $0xf0] sm:$0xff]
    %v98 = vld [vmem:[#allocation2 + $0xf8] sm:$0xff]
    %v99 = vld [vmem:[#allocation2 + $0x100] sm:$0xff]
    %v100 = vld [vmem:[#allocation2 + $0x108] sm:$0xff]
    %v101 = vld [vmem:[#allocation2 + $0x110] sm:$0xff]
    %v102 = vld [vmem:[#allocation2 + $0x118] sm:$0xff]
    %v103 = vld [vmem:[#allocation2 + $0x120] sm:$0xff]
    %v104 = vld [vmem:[#allocation2 + $0x128] sm:$0xff]
    %v105 = vld [vmem:[#allocation2 + $0x130] sm:$0xff]
    %v106 = vld [vmem:[#allocation2 + $0x138] sm:$0xff]
    %v107 = vld [vmem:[#allocation2 + $0x140] sm:$0xff]
    %v108 = vld [vmem:[#allocation2 + $0x148] sm:$0xff]
    %v109 = vld [vmem:[#allocation2 + $0x150] sm:$0xff]
    %v110 = vld [vmem:[#allocation2 + $0x158] sm:$0xff]
    %v111 = vld [vmem:[#allocation2 + $0x160] sm:$0xff]
    %v112 = vld [vmem:[#allocation2 + $0x168] sm:$0xff]
    %v113 = vld [vmem:[#allocation2 + $0x170] sm:$0xff]
    %v114 = vld [vmem:[#allocation2 + $0x178] sm:$0xff]
    %v115 = vld [vmem:[#allocation2 + $0x180] sm:$0xff]
    %v116 = vld [vmem:[#allocation2 + $0x188] sm:$0xff]
    %v117 = vld [vmem:[#allocation2 + $0x190] sm:$0xff]
    %v118 = vld [vmem:[#allocation2 + $0x198] sm:$0xff]
    %v119 = vld [vmem:[#allocation2 + $0x1a0] sm:$0xff]
    %v120 = vld [vmem:[#allocation2 + $0x1a8] sm:$0xff]
    %v121 = vld [vmem:[#allocation2 + $0x1b0] sm:$0xff]
    %v122 = vld [vmem:[#allocation2 + $0x1b8] sm:$0xff]
    %v123 = vld [vmem:[#allocation2 + $0x1c0] sm:$0xff]
    %v124 = vld [vmem:[#allocation2 + $0x1c8] sm:$0xff]
    %v125 = vld [vmem:[#allocation2 + $0x1d0] sm:$0xff]
    %v126 = vld [vmem:[#allocation2 + $0x1d8] sm:$0xff]
    %v127 = vld [vmem:[#allocation2 + $0x1e0] sm:$0xff]
    %v128 = vld [vmem:[#allocation2 + $0x1e8] sm:$0xff]
    %v129 = vld [vmem:[#allocation2 + $0x1f0] sm:$0xff]
    %v130 = vld [vmem:[#allocation2 + $0x1f8] sm:$0xff]
    %v131 = vld [vmem:[#allocation2 + $0x200] sm:$0xff]
    %v132 = vld [vmem:[#allocation2 + $0x208] sm:$0xff]
    %v133 = vld [vmem:[#allocation2 + $0x210] sm:$0xff]
    %v134 = vld [vmem:[#allocation2 + $0x218] sm:$0xff]
    %v135 = vld [vmem:[#allocation2 + $0x220] sm:$0xff]
    %v136 = vld [vmem:[#allocation2 + $0x228] sm:$0xff]
    %v137 = vld [vmem:[#allocation2 + $0x230] sm:$0xff]
    %v138 = vld [vmem:[#allocation2 + $0x238] sm:$0xff]
    %v139 = vld [vmem:[#allocation2 + $0x240] sm:$0xff]
    %v140 = vld [vmem:[#allocation2 + $0x248] sm:$0xff]
    %v141 = vld [vmem:[#allocation2 + $0x250] sm:$0xff]
    %v142 = vld [vmem:[#allocation2 + $0x258] sm:$0xff]
    %v143 = vld [vmem:[#allocation2 + $0x260] sm:$0xff]
    %v144 = vld [vmem:[#allocation2 + $0x268] sm:$0xff]
    %v145 = vld [vmem:[#allocation2 + $0x270] sm:$0xff]
    %v146 = vld [vmem:[#allocation2 + $0x278] sm:$0xff]
    %v147 = vld [vmem:[#allocation2 + $0x280] sm:$0xff]
    %v148 = vld [vmem:[#allocation2 + $0x288] sm:$0xff]
    %v149 = vld [vmem:[#allocation2 + $0x290] sm:$0xff]
    %v150 = vld [vmem:[#allocation2 + $0x298] sm:$0xff]
    %v151 = vld [vmem:[#allocation2 + $0x2a0] sm:$0xff]
    %v152 = vld [vmem:[#allocation2 + $0x2a8] sm:$0xff]
    %v153 = vld [vmem:[#allocation2 + $0x2b0] sm:$0xff]
    %v154 = vld [vmem:[#allocation2 + $0x2b8] sm:$0xff]
    %v155 = vld [vmem:[#allocation2 + $0x2c0] sm:$0xff]
    %v156 = vld [vmem:[#allocation2 + $0x2c8] sm:$0xff]
    %v157 = vld [vmem:[#allocation2 + $0x2d0] sm:$0xff]
    %v158 = vld [vmem:[#allocation2 + $0x2d8] sm:$0xff]
    %v159 = vld [vmem:[#allocation2 + $0x2e0] sm:$0xff]
    %v160 = vld [vmem:[#allocation2 + $0x2e8] sm:$0xff]
    %v161 = vld [vmem:[#allocation2 + $0x2f0] sm:$0xff]
    %v162 = vld [vmem:[#allocation2 + $0x2f8] sm:$0xff]
    %v163 = vld [vmem:[#allocation2 + $0x300] sm:$0xff]
    %v164 = vld [vmem:[#allocation2 + $0x308] sm:$0xff]
    %v165 = vld [vmem:[#allocation2 + $0x310] sm:$0xff]
    %v166 = vld [vmem:[#allocation2 + $0x318] sm:$0xff]
    %v167 = vld [vmem:[#allocation2 + $0x320] sm:$0xff]
    %v168 = vld [vmem:[#allocation2 + $0x328] sm:$0xff]
    %v169 = vld [vmem:[#allocation2 + $0x330] sm:$0xff]
    %v170 = vld [vmem:[#allocation2 + $0x338] sm:$0xff]
    %v171 = vld [vmem:[#allocation2 + $0x340] sm:$0xff]
    %v172 = vld [vmem:[#allocation2 + $0x348] sm:$0xff]
    %v173 = vld [vmem:[#allocation2 + $0x350] sm:$0xff]
    %v174 = vld [vmem:[#allocation2 + $0x358] sm:$0xff]
    %v175 = vld [vmem:[#allocation2 + $0x360] sm:$0xff]
    %v176 = vld [vmem:[#allocation2 + $0x368] sm:$0xff]
    %v177 = vld [vmem:[#allocation2 + $0x370] sm:$0xff]
    %v178 = vld [vmem:[#allocation2 + $0x378] sm:$0xff]
    %v179 = vld [vmem:[#allocation2 + $0x380] sm:$0xff]
    %v180 = vld [vmem:[#allocation2 + $0x388] sm:$0xff]
    %v181 = vld [vmem:[#allocation2 + $0x390] sm:$0xff]
    %v182 = vld [vmem:[#allocation2 + $0x398] sm:$0xff]
    %v183 = vld [vmem:[#allocation2 + $0x3a0] sm:$0xff]
    %v184 = vld [vmem:[#allocation2 + $0x3a8] sm:$0xff]
    %v185 = vld [vmem:[#allocation2 + $0x3b0] sm:$0xff]
    %v186 = vld [vmem:[#allocation2 + $0x3b8] sm:$0xff]
    %v187 = vld [vmem:[#allocation2 + $0x3c0] sm:$0xff]
    %v188 = vld [vmem:[#allocation2 + $0x3c8] sm:$0xff]
    %v189 = vld [vmem:[#allocation2 + $0x3d0] sm:$0xff]
    %v190 = vld [vmem:[#allocation2 + $0x3d8] sm:$0xff]
    %v191 = vld [vmem:[#allocation2 + $0x3e0] sm:$0xff]
    %v192 = vld [vmem:[#allocation2 + $0x3e8] sm:$0xff]
    %v193 = vld [vmem:[#allocation2 + $0x3f0] sm:$0xff]
    %v194 = vld [vmem:[#allocation2 + $0x3f8] sm:$0xff]
    %v195 = vld [vmem:[#allocation2 + $0x400] sm:$0xff]
    %v196 = vld [vmem:[#allocation2 + $0x408] sm:$0xff]
    %v197 = vld [vmem:[#allocation2 + $0x410] sm:$0xff]
    %v198 = vld [vmem:[#allocation2 + $0x418] sm:$0xff]
    %v199 = vld [vmem:[#allocation2 + $0x420] sm:$0xff]
    %v200 = vld [vmem:[#allocation2 + $0x428] sm:$0xff]
    %v201 = vld [vmem:[#allocation2 + $0x430] sm:$0xff]
    %v202 = vld [vmem:[#allocation2 + $0x438] sm:$0xff]
    %v203 = vld [vmem:[#allocation2 + $0x440] sm:$0xff]
    %v204 = vld [vmem:[#allocation2 + $0x448] sm:$0xff]
    %v205 = vld [vmem:[#allocation2 + $0x450] sm:$0xff]
    %v206 = vld [vmem:[#allocation2 + $0x458] sm:$0xff]
    %v207 = vld [vmem:[#allocation2 + $0x460] sm:$0xff]
    %v208 = vld [vmem:[#allocation2 + $0x468] sm:$0xff]
    %v209 = vld [vmem:[#allocation2 + $0x470] sm:$0xff]
    %v210 = vld [vmem:[#allocation2 + $0x478] sm:$0xff]
    %v211 = vld [vmem:[#allocation2 + $0x480] sm:$0xff]
    %v212 = vld [vmem:[#allocation2 + $0x488] sm:$0xff]
    %v213 = vld [vmem:[#allocation2 + $0x490] sm:$0xff]
    %v214 = vld [vmem:[#allocation2 + $0x498] sm:$0xff]
    %v215 = vld [vmem:[#allocation2 + $0x4a0] sm:$0xff]
    %v216 = vld [vmem:[#allocation2 + $0x4a8] sm:$0xff]
    %v217 = vld [vmem:[#allocation2 + $0x4b0] sm:$0xff]
    %v218 = vld [vmem:[#allocation2 + $0x4b8] sm:$0xff]
    %v219 = vld [vmem:[#allocation2 + $0x4c0] sm:$0xff]
    %v220 = vld [vmem:[#allocation2 + $0x4c8] sm:$0xff]
    %v221 = vld [vmem:[#allocation2 + $0x4d0] sm:$0xff]
    %v222 = vld [vmem:[#allocation2 + $0x4d8] sm:$0xff]
    %v223 = vld [vmem:[#allocation2 + $0x4e0] sm:$0xff]
    %v224 = vld [vmem:[#allocation2 + $0x4e8] sm:$0xff]
    %v225 = vld [vmem:[#allocation2 + $0x4f0] sm:$0xff]
    %v226 = vld [vmem:[#allocation2 + $0x4f8] sm:$0xff]
    %v227 = vld [vmem:[#allocation2 + $0x500] sm:$0xff]
    %v228 = vld [vmem:[#allocation2 + $0x508] sm:$0xff]
    %v229 = vld [vmem:[#allocation2 + $0x510] sm:$0xff]
    %v230 = vld [vmem:[#allocation2 + $0x518] sm:$0xff]
    %v231 = vld [vmem:[#allocation2 + $0x520] sm:$0xff]
    %v232 = vld [vmem:[#allocation2 + $0x528] sm:$0xff]
    %v233 = vld [vmem:[#allocation2 + $0x530] sm:$0xff]
    %v234 = vld [vmem:[#allocation2 + $0x538] sm:$0xff]
    %v235 = vld [vmem:[#allocation2 + $0x540] sm:$0xff]
    %v236 = vld [vmem:[#allocation2 + $0x548] sm:$0xff]
    %v237 = vld [vmem:[#allocation2 + $0x550] sm:$0xff]
    %v238 = vld [vmem:[#allocation2 + $0x558] sm:$0xff]
    %v239 = vld [vmem:[#allocation2 + $0x560] sm:$0xff]
    %v240 = vld [vmem:[#allocation2 + $0x568] sm:$0xff]
    %v241 = vld [vmem:[#allocation2 + $0x570] sm:$0xff]
    %v242 = vld [vmem:[#allocation2 + $0x578] sm:$0xff]
    %v243 = vld [vmem:[#allocation2 + $0x580] sm:$0xff]
    %v244 = vld [vmem:[#allocation2 + $0x588] sm:$0xff]
    %v245 = vld [vmem:[#allocation2 + $0x590] sm:$0xff]
    %v246 = vld [vmem:[#allocation2 + $0x598] sm:$0xff]
    %v247 = vld [vmem:[#allocation2 + $0x5a0] sm:$0xff]
    %v248 = vld [vmem:[#allocation2 + $0x5a8] sm:$0xff]
    %v249 = vld [vmem:[#allocation2 + $0x5b0] sm:$0xff]
    %v250 = vld [vmem:[#allocation2 + $0x5b8] sm:$0xff]
    %v251 = vld [vmem:[#allocation2 + $0x5c0] sm:$0xff]
    %v252 = vld [vmem:[#allocation2 + $0x5c8] sm:$0xff]
    %v253 = vld [vmem:[#allocation2 + $0x5d0] sm:$0xff]
    %v254 = vld [vmem:[#allocation2 + $0x5d8] sm:$0xff]
    %v255 = vld [vmem:[#allocation2 + $0x5e0] sm:$0xff]
    %v256 = vld [vmem:[#allocation2 + $0x5e8] sm:$0xff]
    %v257 = vld [vmem:[#allocation2 + $0x5f0] sm:$0xff]
    %v258 = vld [vmem:[#allocation2 + $0x5f8] sm:$0xff]
    %v259 = vld [vmem:[#allocation2 + $0x600] sm:$0xff]
    %v260 = vld [vmem:[#allocation2 + $0x608] sm:$0xff]
    %v261 = vld [vmem:[#allocation2 + $0x610] sm:$0xff]
    %v262 = vld [vmem:[#allocation2 + $0x618] sm:$0xff]
    %v263 = vld [vmem:[%s2] sm:$0xf]
    %v265 = vlaneseq
    %v266 = vshrl.u32 %v265, 7
    %v267 = vsub.s32 0, %v266
    %v268 = vrot.slane %v263, %v267
    %v269 = vlaneseq
    %v270 = vshrl.u32 %v269, 7
    %v271 = vsub.s32 1, %v270
    %v272 = vrot.slane %v263, %v271
    %v273 = vlaneseq
    %v274 = vshrl.u32 %v273, 7
    %v275 = vsub.s32 2, %v274
    %v276 = vrot.slane %v263, %v275
    %v277 = vlaneseq
    %v278 = vshrl.u32 %v277, 7
    %v279 = vsub.s32 3, %v278
    %v280 = vrot.slane %v263, %v279
    %v481 = vunpack.c.l.b16 %v67
    %v482 = vunpack.c.h.b16 %v67
    %v483 = vunpack.c.l.b16 %v68
    %v484 = vunpack.c.h.b16 %v68
    %v485 = vunpack.c.l.b16 %v69
    %v486 = vunpack.c.h.b16 %v69
    %v487 = vunpack.c.l.b16 %v70
    %v488 = vunpack.c.h.b16 %v70
    %v489 = vunpack.c.l.b16 %v71
    %v490 = vunpack.c.h.b16 %v71
    %v491 = vunpack.c.l.b16 %v72
    %v492 = vunpack.c.h.b16 %v72
    %v493 = vunpack.c.l.b16 %v73
    %v494 = vunpack.c.h.b16 %v73
    %v495 = vunpack.c.l.b16 %v74
    %v496 = vunpack.c.h.b16 %v74
    %v497 = vunpack.c.l.b16 %v75
    %v498 = vunpack.c.h.b16 %v75
    %v499 = vunpack.c.l.b16 %v76
    %v500 = vunpack.c.h.b16 %v76
    %v501 = vunpack.c.l.b16 %v77
    %v502 = vunpack.c.h.b16 %v77
    %v503 = vunpack.c.l.b16 %v78
    %v504 = vunpack.c.h.b16 %v78
    %v505 = vunpack.c.l.b16 %v79
    %v506 = vunpack.c.h.b16 %v79
    %v507 = vunpack.c.l.b16 %v80
    %v508 = vunpack.c.h.b16 %v80
    %v509 = vunpack.c.l.b16 %v81
    %v510 = vunpack.c.h.b16 %v81
    %v511 = vunpack.c.l.b16 %v82
    %v512 = vunpack.c.h.b16 %v82
    %v513 = vunpack.c.l.b16 %v83
    %v514 = vunpack.c.h.b16 %v83
    %v515 = vunpack.c.l.b16 %v84
    %v516 = vunpack.c.h.b16 %v84
    %v517 = vunpack.c.l.b16 %v85
    %v518 = vunpack.c.h.b16 %v85
    %v519 = vunpack.c.l.b16 %v86
    %v520 = vunpack.c.h.b16 %v86
    %v521 = vunpack.c.l.b16 %v87
    %v522 = vunpack.c.h.b16 %v87
    %v523 = vunpack.c.l.b16 %v88
    %v524 = vunpack.c.h.b16 %v88
    %v525 = vunpack.c.l.b16 %v89
    %v526 = vunpack.c.h.b16 %v89
    %v527 = vunpack.c.l.b16 %v90
    %v528 = vunpack.c.h.b16 %v90
    %v529 = vunpack.c.l.b16 %v91
    %v530 = vunpack.c.h.b16 %v91
    %v531 = vunpack.c.l.b16 %v92
    %v532 = vunpack.c.h.b16 %v92
    %v533 = vunpack.c.l.b16 %v93
    %v534 = vunpack.c.h.b16 %v93
    %v535 = vunpack.c.l.b16 %v94
    %v536 = vunpack.c.h.b16 %v94
    %v537 = vunpack.c.l.b16 %v95
    %v538 = vunpack.c.h.b16 %v95
    %v539 = vunpack.c.l.b16 %v96
    %v540 = vunpack.c.h.b16 %v96
    %v541 = vunpack.c.l.b16 %v97
    %v542 = vunpack.c.h.b16 %v97
    %v543 = vunpack.c.l.b16 %v98
    %v544 = vunpack.c.h.b16 %v98
    %v545 = vunpack.c.l.b16 %v99
    %v546 = vunpack.c.h.b16 %v99
    %v547 = vunpack.c.l.b16 %v100
    %v548 = vunpack.c.h.b16 %v100
    %v549 = vunpack.c.l.b16 %v101
    %v550 = vunpack.c.h.b16 %v101
    %v551 = vunpack.c.l.b16 %v102
    %v552 = vunpack.c.h.b16 %v102
    %v553 = vunpack.c.l.b16 %v103
    %v554 = vunpack.c.h.b16 %v103
    %v555 = vunpack.c.l.b16 %v104
    %v556 = vunpack.c.h.b16 %v104
    %v557 = vunpack.c.l.b16 %v105
    %v558 = vunpack.c.h.b16 %v105
    %v559 = vunpack.c.l.b16 %v106
    %v560 = vunpack.c.h.b16 %v106
    %v561 = vunpack.c.l.b16 %v107
    %v562 = vunpack.c.h.b16 %v107
    %v563 = vunpack.c.l.b16 %v108
    %v564 = vunpack.c.h.b16 %v108
    %v565 = vunpack.c.l.b16 %v109
    %v566 = vunpack.c.h.b16 %v109
    %v567 = vunpack.c.l.b16 %v110
    %v568 = vunpack.c.h.b16 %v110
    %v569 = vunpack.c.l.b16 %v111
    %v570 = vunpack.c.h.b16 %v111
    %v571 = vunpack.c.l.b16 %v112
    %v572 = vunpack.c.h.b16 %v112
    %v573 = vunpack.c.l.b16 %v113
    %v574 = vunpack.c.h.b16 %v113
    %v575 = vunpack.c.l.b16 %v114
    %v576 = vunpack.c.h.b16 %v114
    %v577 = vunpack.c.l.b16 %v115
    %v578 = vunpack.c.h.b16 %v115
    %v579 = vunpack.c.l.b16 %v116
    %v580 = vunpack.c.h.b16 %v116
    %v581 = vunpack.c.l.b16 %v117
    %v582 = vunpack.c.h.b16 %v117
    %v583 = vunpack.c.l.b16 %v118
    %v584 = vunpack.c.h.b16 %v118
    %v585 = vunpack.c.l.b16 %v119
    %v586 = vunpack.c.h.b16 %v119
    %v587 = vunpack.c.l.b16 %v120
    %v588 = vunpack.c.h.b16 %v120
    %v589 = vunpack.c.l.b16 %v121
    %v590 = vunpack.c.h.b16 %v121
    %v591 = vunpack.c.l.b16 %v122
    %v592 = vunpack.c.h.b16 %v122
    %v593 = vunpack.c.l.b16 %v123
    %v594 = vunpack.c.h.b16 %v123
    %v595 = vunpack.c.l.b16 %v124
    %v596 = vunpack.c.h.b16 %v124
    %v597 = vunpack.c.l.b16 %v125
    %v598 = vunpack.c.h.b16 %v125
    %v599 = vunpack.c.l.b16 %v126
    %v600 = vunpack.c.h.b16 %v126
    %v601 = vunpack.c.l.b16 %v127
    %v602 = vunpack.c.h.b16 %v127
    %v603 = vunpack.c.l.b16 %v128
    %v604 = vunpack.c.h.b16 %v128
    %v605 = vunpack.c.l.b16 %v129
    %v606 = vunpack.c.h.b16 %v129
    %v607 = vunpack.c.l.b16 %v130
    %v608 = vunpack.c.h.b16 %v130
    %v609 = vunpack.c.l.b16 %v131
    %v610 = vunpack.c.h.b16 %v131
    %v611 = vunpack.c.l.b16 %v132
    %v612 = vunpack.c.h.b16 %v132
    %v613 = vunpack.c.l.b16 %v133
    %v614 = vunpack.c.h.b16 %v133
    %v615 = vunpack.c.l.b16 %v134
    %v616 = vunpack.c.h.b16 %v134
    %v617 = vunpack.c.l.b16 %v135
    %v618 = vunpack.c.h.b16 %v135
    %v619 = vunpack.c.l.b16 %v136
    %v620 = vunpack.c.h.b16 %v136
    %v621 = vunpack.c.l.b16 %v137
    %v622 = vunpack.c.h.b16 %v137
    %v623 = vunpack.c.l.b16 %v138
    %v624 = vunpack.c.h.b16 %v138
    %v625 = vunpack.c.l.b16 %v139
    %v626 = vunpack.c.h.b16 %v139
    %v627 = vunpack.c.l.b16 %v140
    %v628 = vunpack.c.h.b16 %v140
    %v629 = vunpack.c.l.b16 %v141
    %v630 = vunpack.c.h.b16 %v141
    %v631 = vunpack.c.l.b16 %v142
    %v632 = vunpack.c.h.b16 %v142
    %v633 = vunpack.c.l.b16 %v143
    %v634 = vunpack.c.h.b16 %v143
    %v635 = vunpack.c.l.b16 %v144
    %v636 = vunpack.c.h.b16 %v144
    %v637 = vunpack.c.l.b16 %v145
    %v638 = vunpack.c.h.b16 %v145
    %v639 = vunpack.c.l.b16 %v146
    %v640 = vunpack.c.h.b16 %v146
    %v641 = vunpack.c.l.b16 %v147
    %v642 = vunpack.c.h.b16 %v147
    %v643 = vunpack.c.l.b16 %v148
    %v644 = vunpack.c.h.b16 %v148
    %v645 = vunpack.c.l.b16 %v149
    %v646 = vunpack.c.h.b16 %v149
    %v647 = vunpack.c.l.b16 %v150
    %v648 = vunpack.c.h.b16 %v150
    %v649 = vunpack.c.l.b16 %v151
    %v650 = vunpack.c.h.b16 %v151
    %v651 = vunpack.c.l.b16 %v152
    %v652 = vunpack.c.h.b16 %v152
    %v653 = vunpack.c.l.b16 %v153
    %v654 = vunpack.c.h.b16 %v153
    %v655 = vunpack.c.l.b16 %v154
    %v656 = vunpack.c.h.b16 %v154
    %v657 = vunpack.c.l.b16 %v155
    %v658 = vunpack.c.h.b16 %v155
    %v659 = vunpack.c.l.b16 %v156
    %v660 = vunpack.c.h.b16 %v156
    %v661 = vunpack.c.l.b16 %v157
    %v662 = vunpack.c.h.b16 %v157
    %v663 = vunpack.c.l.b16 %v158
    %v664 = vunpack.c.h.b16 %v158
    %v665 = vunpack.c.l.b16 %v159
    %v666 = vunpack.c.h.b16 %v159
    %v667 = vunpack.c.l.b16 %v160
    %v668 = vunpack.c.h.b16 %v160
    %v669 = vunpack.c.l.b16 %v161
    %v670 = vunpack.c.h.b16 %v161
    %v671 = vunpack.c.l.b16 %v162
    %v672 = vunpack.c.h.b16 %v162
    %v673 = vunpack.c.l.b16 %v163
    %v674 = vunpack.c.h.b16 %v163
    %v675 = vunpack.c.l.b16 %v164
    %v676 = vunpack.c.h.b16 %v164
    %v677 = vunpack.c.l.b16 %v165
    %v678 = vunpack.c.h.b16 %v165
    %v679 = vunpack.c.l.b16 %v166
    %v680 = vunpack.c.h.b16 %v166
    %v681 = vunpack.c.l.b16 %v167
    %v682 = vunpack.c.h.b16 %v167
    %v683 = vunpack.c.l.b16 %v168
    %v684 = vunpack.c.h.b16 %v168
    %v685 = vunpack.c.l.b16 %v169
    %v686 = vunpack.c.h.b16 %v169
    %v687 = vunpack.c.l.b16 %v170
    %v688 = vunpack.c.h.b16 %v170
    %v689 = vunpack.c.l.b16 %v171
    %v690 = vunpack.c.h.b16 %v171
    %v691 = vunpack.c.l.b16 %v172
    %v692 = vunpack.c.h.b16 %v172
    %v693 = vunpack.c.l.b16 %v173
    %v694 = vunpack.c.h.b16 %v173
    %v695 = vunpack.c.l.b16 %v174
    %v696 = vunpack.c.h.b16 %v174
    %v697 = vunpack.c.l.b16 %v175
    %v698 = vunpack.c.h.b16 %v175
    %v699 = vunpack.c.l.b16 %v176
    %v700 = vunpack.c.h.b16 %v176
    %v701 = vunpack.c.l.b16 %v177
    %v702 = vunpack.c.h.b16 %v177
    %v703 = vunpack.c.l.b16 %v178
    %v704 = vunpack.c.h.b16 %v178
    %v705 = vunpack.c.l.b16 %v179
    %v706 = vunpack.c.h.b16 %v179
    %v707 = vunpack.c.l.b16 %v180
    %v708 = vunpack.c.h.b16 %v180
    %v709 = vunpack.c.l.b16 %v181
    %v710 = vunpack.c.h.b16 %v181
    %v711 = vunpack.c.l.b16 %v182
    %v712 = vunpack.c.h.b16 %v182
    %v713 = vunpack.c.l.b16 %v183
    %v714 = vunpack.c.h.b16 %v183
    %v715 = vunpack.c.l.b16 %v184
    %v716 = vunpack.c.h.b16 %v184
    %v717 = vunpack.c.l.b16 %v185
    %v718 = vunpack.c.h.b16 %v185
    %v719 = vunpack.c.l.b16 %v186
    %v720 = vunpack.c.h.b16 %v186
    %v721 = vunpack.c.l.b16 %v187
    %v722 = vunpack.c.h.b16 %v187
    %v723 = vunpack.c.l.b16 %v188
    %v724 = vunpack.c.h.b16 %v188
    %v725 = vunpack.c.l.b16 %v189
    %v726 = vunpack.c.h.b16 %v189
    %v727 = vunpack.c.l.b16 %v190
    %v728 = vunpack.c.h.b16 %v190
    %v729 = vunpack.c.l.b16 %v191
    %v730 = vunpack.c.h.b16 %v191
    %v731 = vunpack.c.l.b16 %v192
    %v732 = vunpack.c.h.b16 %v192
    %v733 = vunpack.c.l.b16 %v193
    %v734 = vunpack.c.h.b16 %v193
    %v735 = vunpack.c.l.b16 %v194
    %v736 = vunpack.c.h.b16 %v194
    %v737 = vunpack.c.l.b16 %v195
    %v738 = vunpack.c.h.b16 %v195
    %v739 = vunpack.c.l.b16 %v196
    %v740 = vunpack.c.h.b16 %v196
    %v741 = vunpack.c.l.b16 %v197
    %v742 = vunpack.c.h.b16 %v197
    %v743 = vunpack.c.l.b16 %v198
    %v744 = vunpack.c.h.b16 %v198
    %v745 = vunpack.c.l.b16 %v199
    %v746 = vunpack.c.h.b16 %v199
    %v747 = vunpack.c.l.b16 %v200
    %v748 = vunpack.c.h.b16 %v200
    %v749 = vunpack.c.l.b16 %v201
    %v750 = vunpack.c.h.b16 %v201
    %v751 = vunpack.c.l.b16 %v202
    %v752 = vunpack.c.h.b16 %v202
    %v753 = vunpack.c.l.b16 %v203
    %v754 = vunpack.c.h.b16 %v203
    %v755 = vunpack.c.l.b16 %v204
    %v756 = vunpack.c.h.b16 %v204
    %v757 = vunpack.c.l.b16 %v205
    %v758 = vunpack.c.h.b16 %v205
    %v759 = vunpack.c.l.b16 %v206
    %v760 = vunpack.c.h.b16 %v206
    %v761 = vunpack.c.l.b16 %v207
    %v762 = vunpack.c.h.b16 %v207
    %v763 = vunpack.c.l.b16 %v208
    %v764 = vunpack.c.h.b16 %v208
    %v765 = vunpack.c.l.b16 %v209
    %v766 = vunpack.c.h.b16 %v209
    %v767 = vunpack.c.l.b16 %v210
    %v768 = vunpack.c.h.b16 %v210
    %v769 = vunpack.c.l.b16 %v211
    %v770 = vunpack.c.h.b16 %v211
    %v771 = vunpack.c.l.b16 %v212
    %v772 = vunpack.c.h.b16 %v212
    %v773 = vunpack.c.l.b16 %v213
    %v774 = vunpack.c.h.b16 %v213
    %v775 = vunpack.c.l.b16 %v214
    %v776 = vunpack.c.h.b16 %v214
    %v777 = vunpack.c.l.b16 %v215
    %v778 = vunpack.c.h.b16 %v215
    %v779 = vunpack.c.l.b16 %v216
    %v780 = vunpack.c.h.b16 %v216
    %v781 = vunpack.c.l.b16 %v217
    %v782 = vunpack.c.h.b16 %v217
    %v783 = vunpack.c.l.b16 %v218
    %v784 = vunpack.c.h.b16 %v218
    %v785 = vunpack.c.l.b16 %v219
    %v786 = vunpack.c.h.b16 %v219
    %v787 = vunpack.c.l.b16 %v220
    %v788 = vunpack.c.h.b16 %v220
    %v789 = vunpack.c.l.b16 %v221
    %v790 = vunpack.c.h.b16 %v221
    %v791 = vunpack.c.l.b16 %v222
    %v792 = vunpack.c.h.b16 %v222
    %v793 = vunpack.c.l.b16 %v223
    %v794 = vunpack.c.h.b16 %v223
    %v795 = vunpack.c.l.b16 %v224
    %v796 = vunpack.c.h.b16 %v224
    %v797 = vunpack.c.l.b16 %v225
    %v798 = vunpack.c.h.b16 %v225
    %v799 = vunpack.c.l.b16 %v226
    %v800 = vunpack.c.h.b16 %v226
    %v801 = vunpack.c.l.b16 %v227
    %v802 = vunpack.c.h.b16 %v227
    %v803 = vunpack.c.l.b16 %v228
    %v804 = vunpack.c.h.b16 %v228
    %v805 = vunpack.c.l.b16 %v229
    %v806 = vunpack.c.h.b16 %v229
    %v807 = vunpack.c.l.b16 %v230
    %v808 = vunpack.c.h.b16 %v230
    %v809 = vunpack.c.l.b16 %v231
    %v810 = vunpack.c.h.b16 %v231
    %v811 = vunpack.c.l.b16 %v232
    %v812 = vunpack.c.h.b16 %v232
    %v813 = vunpack.c.l.b16 %v233
    %v814 = vunpack.c.h.b16 %v233
    %v815 = vunpack.c.l.b16 %v234
    %v816 = vunpack.c.h.b16 %v234
    %v817 = vunpack.c.l.b16 %v235
    %v818 = vunpack.c.h.b16 %v235
    %v819 = vunpack.c.l.b16 %v236
    %v820 = vunpack.c.h.b16 %v236
    %v821 = vunpack.c.l.b16 %v237
    %v822 = vunpack.c.h.b16 %v237
    %v823 = vunpack.c.l.b16 %v238
    %v824 = vunpack.c.h.b16 %v238
    %v825 = vunpack.c.l.b16 %v239
    %v826 = vunpack.c.h.b16 %v239
    %v827 = vunpack.c.l.b16 %v240
    %v828 = vunpack.c.h.b16 %v240
    %v829 = vunpack.c.l.b16 %v241
    %v830 = vunpack.c.h.b16 %v241
    %v831 = vunpack.c.l.b16 %v242
    %v832 = vunpack.c.h.b16 %v242
    %v833 = vunpack.c.l.b16 %v243
    %v834 = vunpack.c.h.b16 %v243
    %v835 = vunpack.c.l.b16 %v244
    %v836 = vunpack.c.h.b16 %v244
    %v837 = vunpack.c.l.b16 %v245
    %v838 = vunpack.c.h.b16 %v245
    %v839 = vunpack.c.l.b16 %v246
    %v840 = vunpack.c.h.b16 %v246
    %v841 = vunpack.c.l.b16 %v247
    %v842 = vunpack.c.h.b16 %v247
    %v843 = vunpack.c.l.b16 %v248
    %v844 = vunpack.c.h.b16 %v248
    %v845 = vunpack.c.l.b16 %v249
    %v846 = vunpack.c.h.b16 %v249
    %v847 = vunpack.c.l.b16 %v250
    %v848 = vunpack.c.h.b16 %v250
    %v849 = vunpack.c.l.b16 %v251
    %v850 = vunpack.c.h.b16 %v251
    %v851 = vunpack.c.l.b16 %v252
    %v852 = vunpack.c.h.b16 %v252
    %v853 = vunpack.c.l.b16 %v253
    %v854 = vunpack.c.h.b16 %v253
    %v855 = vunpack.c.l.b16 %v254
    %v856 = vunpack.c.h.b16 %v254
    %v857 = vunpack.c.l.b16 %v255
    %v858 = vunpack.c.h.b16 %v255
    %v859 = vunpack.c.l.b16 %v256
    %v860 = vunpack.c.h.b16 %v256
    %v861 = vunpack.c.l.b16 %v257
    %v862 = vunpack.c.h.b16 %v257
    %v863 = vunpack.c.l.b16 %v258
    %v864 = vunpack.c.h.b16 %v258
    %v865 = vunpack.c.l.b16 %v259
    %v866 = vunpack.c.h.b16 %v259
    %v867 = vunpack.c.l.b16 %v260
    %v868 = vunpack.c.h.b16 %v260
    %v869 = vunpack.c.l.b16 %v261
    %v870 = vunpack.c.h.b16 %v261
    %v871 = vunpack.c.l.b16 %v262
    %v872 = vunpack.c.h.b16 %v262
    %v873 = vpack.c.b16 %v485, %v481
    %v874 = vpack.c.b16 %v486, %v482
    %v875 = vpack.c.b16 %v487, %v483
    %v876 = vpack.c.b16 %v488, %v484
    %v877 = vpack.c.b16 %v493, %v489
    %v878 = vpack.c.b16 %v494, %v490
    %v879 = vpack.c.b16 %v495, %v491
    %v880 = vpack.c.b16 %v496, %v492
    %v881 = vpack.c.b16 %v501, %v497
    %v882 = vpack.c.b16 %v502, %v498
    %v883 = vpack.c.b16 %v503, %v499
    %v884 = vpack.c.b16 %v504, %v500
    %v885 = vpack.c.b16 %v509, %v505
    %v886 = vpack.c.b16 %v510, %v506
    %v887 = vpack.c.b16 %v511, %v507
    %v888 = vpack.c.b16 %v512, %v508
    %v889 = vpack.c.b16 %v517, %v513
    %v890 = vpack.c.b16 %v518, %v514
    %v891 = vpack.c.b16 %v519, %v515
    %v892 = vpack.c.b16 %v520, %v516
    %v893 = vpack.c.b16 %v525, %v521
    %v894 = vpack.c.b16 %v526, %v522
    %v895 = vpack.c.b16 %v527, %v523
    %v896 = vpack.c.b16 %v528, %v524
    %v897 = vpack.c.b16 %v533, %v529
    %v898 = vpack.c.b16 %v534, %v530
    %v899 = vpack.c.b16 %v535, %v531
    %v900 = vpack.c.b16 %v536, %v532
    %v901 = vpack.c.b16 %v541, %v537
    %v902 = vpack.c.b16 %v542, %v538
    %v903 = vpack.c.b16 %v543, %v539
    %v904 = vpack.c.b16 %v544, %v540
    %v905 = vpack.c.b16 %v549, %v545
    %v906 = vpack.c.b16 %v550, %v546
    %v907 = vpack.c.b16 %v551, %v547
    %v908 = vpack.c.b16 %v552, %v548
    %v909 = vpack.c.b16 %v557, %v553
    %v910 = vpack.c.b16 %v558, %v554
    %v911 = vpack.c.b16 %v559, %v555
    %v912 = vpack.c.b16 %v560, %v556
    %v913 = vpack.c.b16 %v565, %v561
    %v914 = vpack.c.b16 %v566, %v562
    %v915 = vpack.c.b16 %v567, %v563
    %v916 = vpack.c.b16 %v568, %v564
    %v917 = vpack.c.b16 %v573, %v569
    %v918 = vpack.c.b16 %v574, %v570
    %v919 = vpack.c.b16 %v575, %v571
    %v920 = vpack.c.b16 %v576, %v572
    %v921 = vpack.c.b16 %v581, %v577
    %v922 = vpack.c.b16 %v582, %v578
    %v923 = vpack.c.b16 %v583, %v579
    %v924 = vpack.c.b16 %v584, %v580
    %v925 = vpack.c.b16 %v589, %v585
    %v926 = vpack.c.b16 %v590, %v586
    %v927 = vpack.c.b16 %v591, %v587
    %v928 = vpack.c.b16 %v592, %v588
    %v929 = vpack.c.b16 %v597, %v593
    %v930 = vpack.c.b16 %v598, %v594
    %v931 = vpack.c.b16 %v599, %v595
    %v932 = vpack.c.b16 %v600, %v596
    %v933 = vpack.c.b16 %v605, %v601
    %v934 = vpack.c.b16 %v606, %v602
    %v935 = vpack.c.b16 %v607, %v603
    %v936 = vpack.c.b16 %v608, %v604
    %v937 = vpack.c.b16 %v613, %v609
    %v938 = vpack.c.b16 %v614, %v610
    %v939 = vpack.c.b16 %v615, %v611
    %v940 = vpack.c.b16 %v616, %v612
    %v941 = vpack.c.b16 %v621, %v617
    %v942 = vpack.c.b16 %v622, %v618
    %v943 = vpack.c.b16 %v623, %v619
    %v944 = vpack.c.b16 %v624, %v620
    %v945 = vpack.c.b16 %v629, %v625
    %v946 = vpack.c.b16 %v630, %v626
    %v947 = vpack.c.b16 %v631, %v627
    %v948 = vpack.c.b16 %v632, %v628
    %v949 = vpack.c.b16 %v637, %v633
    %v950 = vpack.c.b16 %v638, %v634
    %v951 = vpack.c.b16 %v639, %v635
    %v952 = vpack.c.b16 %v640, %v636
    %v953 = vpack.c.b16 %v645, %v641
    %v954 = vpack.c.b16 %v646, %v642
    %v955 = vpack.c.b16 %v647, %v643
    %v956 = vpack.c.b16 %v648, %v644
    %v957 = vpack.c.b16 %v653, %v649
    %v958 = vpack.c.b16 %v654, %v650
    %v959 = vpack.c.b16 %v655, %v651
    %v960 = vpack.c.b16 %v656, %v652
    %v961 = vpack.c.b16 %v661, %v657
    %v962 = vpack.c.b16 %v662, %v658
    %v963 = vpack.c.b16 %v663, %v659
    %v964 = vpack.c.b16 %v664, %v660
    %v965 = vpack.c.b16 %v669, %v665
    %v966 = vpack.c.b16 %v670, %v666
    %v967 = vpack.c.b16 %v671, %v667
    %v968 = vpack.c.b16 %v672, %v668
    %v969 = vpack.c.b16 %v677, %v673
    %v970 = vpack.c.b16 %v678, %v674
    %v971 = vpack.c.b16 %v679, %v675
    %v972 = vpack.c.b16 %v680, %v676
    %v973 = vpack.c.b16 %v685, %v681
    %v974 = vpack.c.b16 %v686, %v682
    %v975 = vpack.c.b16 %v687, %v683
    %v976 = vpack.c.b16 %v688, %v684
    %v977 = vpack.c.b16 %v693, %v689
    %v978 = vpack.c.b16 %v694, %v690
    %v979 = vpack.c.b16 %v695, %v691
    %v980 = vpack.c.b16 %v696, %v692
    %v981 = vpack.c.b16 %v701, %v697
    %v982 = vpack.c.b16 %v702, %v698
    %v983 = vpack.c.b16 %v703, %v699
    %v984 = vpack.c.b16 %v704, %v700
    %v985 = vpack.c.b16 %v709, %v705
    %v986 = vpack.c.b16 %v710, %v706
    %v987 = vpack.c.b16 %v711, %v707
    %v988 = vpack.c.b16 %v712, %v708
    %v989 = vpack.c.b16 %v717, %v713
    %v990 = vpack.c.b16 %v718, %v714
    %v991 = vpack.c.b16 %v719, %v715
    %v992 = vpack.c.b16 %v720, %v716
    %v993 = vpack.c.b16 %v725, %v721
    %v994 = vpack.c.b16 %v726, %v722
    %v995 = vpack.c.b16 %v727, %v723
    %v996 = vpack.c.b16 %v728, %v724
    %v997 = vpack.c.b16 %v733, %v729
    %v998 = vpack.c.b16 %v734, %v730
    %v999 = vpack.c.b16 %v735, %v731
    %v1000 = vpack.c.b16 %v736, %v732
    %v1001 = vpack.c.b16 %v741, %v737
    %v1002 = vpack.c.b16 %v742, %v738
    %v1003 = vpack.c.b16 %v743, %v739
    %v1004 = vpack.c.b16 %v744, %v740
    %v1005 = vpack.c.b16 %v749, %v745
    %v1006 = vpack.c.b16 %v750, %v746
    %v1007 = vpack.c.b16 %v751, %v747
    %v1008 = vpack.c.b16 %v752, %v748
    %v1009 = vpack.c.b16 %v757, %v753
    %v1010 = vpack.c.b16 %v758, %v754
    %v1011 = vpack.c.b16 %v759, %v755
    %v1012 = vpack.c.b16 %v760, %v756
    %v1013 = vpack.c.b16 %v765, %v761
    %v1014 = vpack.c.b16 %v766, %v762
    %v1015 = vpack.c.b16 %v767, %v763
    %v1016 = vpack.c.b16 %v768, %v764
    %v1017 = vpack.c.b16 %v773, %v769
    %v1018 = vpack.c.b16 %v774, %v770
    %v1019 = vpack.c.b16 %v775, %v771
    %v1020 = vpack.c.b16 %v776, %v772
    %v1021 = vpack.c.b16 %v781, %v777
    %v1022 = vpack.c.b16 %v782, %v778
    %v1023 = vpack.c.b16 %v783, %v779
    %v1024 = vpack.c.b16 %v784, %v780
    %v1025 = vpack.c.b16 %v789, %v785
    %v1026 = vpack.c.b16 %v790, %v786
    %v1027 = vpack.c.b16 %v791, %v787
    %v1028 = vpack.c.b16 %v792, %v788
    %v1029 = vpack.c.b16 %v797, %v793
    %v1030 = vpack.c.b16 %v798, %v794
    %v1031 = vpack.c.b16 %v799, %v795
    %v1032 = vpack.c.b16 %v800, %v796
    %v1033 = vpack.c.b16 %v805, %v801
    %v1034 = vpack.c.b16 %v806, %v802
    %v1035 = vpack.c.b16 %v807, %v803
    %v1036 = vpack.c.b16 %v808, %v804
    %v1037 = vpack.c.b16 %v813, %v809
    %v1038 = vpack.c.b16 %v814, %v810
    %v1039 = vpack.c.b16 %v815, %v811
    %v1040 = vpack.c.b16 %v816, %v812
    %v1041 = vpack.c.b16 %v821, %v817
    %v1042 = vpack.c.b16 %v822, %v818
    %v1043 = vpack.c.b16 %v823, %v819
    %v1044 = vpack.c.b16 %v824, %v820
    %v1045 = vpack.c.b16 %v829, %v825
    %v1046 = vpack.c.b16 %v830, %v826
    %v1047 = vpack.c.b16 %v831, %v827
    %v1048 = vpack.c.b16 %v832, %v828
    %v1049 = vpack.c.b16 %v837, %v833
    %v1050 = vpack.c.b16 %v838, %v834
    %v1051 = vpack.c.b16 %v839, %v835
    %v1052 = vpack.c.b16 %v840, %v836
    %v1053 = vpack.c.b16 %v845, %v841
    %v1054 = vpack.c.b16 %v846, %v842
    %v1055 = vpack.c.b16 %v847, %v843
    %v1056 = vpack.c.b16 %v848, %v844
    %v1057 = vpack.c.b16 %v853, %v849
    %v1058 = vpack.c.b16 %v854, %v850
    %v1059 = vpack.c.b16 %v855, %v851
    %v1060 = vpack.c.b16 %v856, %v852
    %v1061 = vpack.c.b16 %v861, %v857
    %v1062 = vpack.c.b16 %v862, %v858
    %v1063 = vpack.c.b16 %v863, %v859
    %v1064 = vpack.c.b16 %v864, %v860
    %v1065 = vpack.c.b16 %v869, %v865
    %v1066 = vpack.c.b16 %v870, %v866
    %v1067 = vpack.c.b16 %v871, %v867
    %v1068 = vpack.c.b16 %v872, %v868
    %vm1265 = vcmask 130048
    %v1267 = vsel %vm1265, %v66, 0
    %1269 = vmatprep.subr.bf16.mxu0 %v874
    %1270 = vmatpush1.bf16.msra.mxu0 %v873
    %1271 = vmatprep.subr.bf16.mxu0 %v878
    %1272 = vmatpush1.bf16.msra.mxu0 %v877
    %1273 = vmatprep.subr.bf16.mxu0 %v882
    %1274 = vmatpush1.bf16.msra.mxu0 %v881
    %1275 = vmatprep.subr.bf16.mxu0 %v886
    %1276 = vmatpush1.bf16.msra.mxu0 %v885
    %1277 = vmatprep.subr.bf16.mxu0 %v890
    %1278 = vmatpush1.bf16.msra.mxu0 %v889
    %1279 = vmatprep.subr.bf16.mxu0 %v894
    %1280 = vmatpush1.bf16.msra.mxu0 %v893
    %1281 = vmatprep.subr.bf16.mxu0 %v898
    %1282 = vmatpush1.bf16.msra.mxu0 %v897
    %1283 = vmatprep.subr.bf16.mxu0 %v902
    %1284 = vmatpush1.bf16.msra.mxu0 %v901
    %1285 = vmatprep.subr.bf16.mxu0 %v906
    %1286 = vmatpush1.bf16.msra.mxu0 %v905
    %1287 = vmatprep.subr.bf16.mxu0 %v910
    %1288 = vmatpush1.bf16.msra.mxu0 %v909
    %1289 = vmatprep.subr.bf16.mxu0 %v914
    %1290 = vmatpush1.bf16.msra.mxu0 %v913
    %1291 = vmatprep.subr.bf16.mxu0 %v918
    %1292 = vmatpush1.bf16.msra.mxu0 %v917
    %1293 = vmatprep.subr.bf16.mxu0 %v922
    %1294 = vmatpush1.bf16.msra.mxu0 %v921
    %1295 = vmatprep.subr.bf16.mxu0 %v926
    %1296 = vmatpush1.bf16.msra.mxu0 %v925
    %1297 = vmatprep.subr.bf16.mxu0 %v930
    %1298 = vmatpush1.bf16.msra.mxu0 %v929
    %1299 = vmatprep.subr.bf16.mxu0 %v934
    %1300 = vmatpush1.bf16.msra.mxu0 %v933
    %1301 = vmatprep.mubr.bf16.mxu0 %v61
    %1302 = vmatmul.mubr.bf16.gmra.mrb[0].mxu0 %v60
    %v1303 = vpop.f32.mrb[0].mxu0
    %v1304 = vadd.f32 %v268, %v1303
    %v1305 = vpop.f32.mrb[0].mxu0
    %v1306 = vadd.f32 %v272, %v1305
    %v1307 = vpop.f32.mrb[0].mxu0
    %v1308 = vpop.f32.mrb[0].mxu0
    %1309 = vdwg.mxu0
    %1310 = vmatprep.subr.bf16.mxu0 %v938
    %1311 = vmatpush1.bf16.msra.mxu0 %v937
    %1312 = vmatprep.subr.bf16.mxu0 %v942
    %1313 = vmatpush1.bf16.msra.mxu0 %v941
    %1314 = vmatprep.subr.bf16.mxu0 %v946
    %1315 = vmatpush1.bf16.msra.mxu0 %v945
    %1316 = vmatprep.subr.bf16.mxu0 %v950
    %1317 = vmatpush1.bf16.msra.mxu0 %v949
    %1318 = vmatprep.subr.bf16.mxu0 %v954
    %1319 = vmatpush1.bf16.msra.mxu0 %v953
    %1320 = vmatprep.subr.bf16.mxu0 %v958
    %1321 = vmatpush1.bf16.msra.mxu0 %v957
    %1322 = vmatprep.subr.bf16.mxu0 %v962
    %1323 = vmatpush1.bf16.msra.mxu0 %v961
    %1324 = vmatprep.subr.bf16.mxu0 %v966
    %1325 = vmatpush1.bf16.msra.mxu0 %v965
    %1326 = vmatprep.subr.bf16.mxu0 %v970
    %1327 = vmatpush1.bf16.msra.mxu0 %v969
    %1328 = vmatprep.subr.bf16.mxu0 %v974
    %1329 = vmatpush1.bf16.msra.mxu0 %v973
    %1330 = vmatprep.subr.bf16.mxu0 %v978
    %1331 = vmatpush1.bf16.msra.mxu0 %v977
    %1332 = vmatprep.subr.bf16.mxu0 %v982
    %1333 = vmatpush1.bf16.msra.mxu0 %v981
    %1334 = vmatprep.subr.bf16.mxu0 %v986
    %1335 = vmatpush1.bf16.msra.mxu0 %v985
    %1336 = vmatprep.subr.bf16.mxu0 %v990
    %1337 = vmatpush1.bf16.msra.mxu0 %v989
    %1338 = vmatprep.subr.bf16.mxu0 %v994
    %1339 = vmatpush1.bf16.msra.mxu0 %v993
    %1340 = vmatprep.subr.bf16.mxu0 %v998
    %1341 = vmatpush1.bf16.msra.mxu0 %v997
    %1342 = vmatprep.mubr.bf16.mxu0 %v63
    %1343 = vmatmul.mubr.bf16.gmra.mrb[0].mxu0 %v62
    %v1344 = vpop.f32.mrb[0].mxu0
    %v1345 = vadd.f32 %v1304, %v1344
    %v1346 = vpop.f32.mrb[0].mxu0
    %v1347 = vadd.f32 %v1306, %v1346
    %v1348 = vpop.f32.mrb[0].mxu0
    %v1349 = vpop.f32.mrb[0].mxu0
    %1350 = vdwg.mxu0
    %1351 = vmatprep.subr.bf16.mxu0 %v1002
    %1352 = vmatpush1.bf16.msra.mxu0 %v1001
    %1353 = vmatprep.subr.bf16.mxu0 %v1006
    %1354 = vmatpush1.bf16.msra.mxu0 %v1005
    %1355 = vmatprep.subr.bf16.mxu0 %v1010
    %1356 = vmatpush1.bf16.msra.mxu0 %v1009
    %1357 = vmatprep.subr.bf16.mxu0 %v1014
    %1358 = vmatpush1.bf16.msra.mxu0 %v1013
    %1359 = vmatprep.subr.bf16.mxu0 %v1018
    %1360 = vmatpush1.bf16.msra.mxu0 %v1017
    %1361 = vmatprep.subr.bf16.mxu0 %v1022
    %1362 = vmatpush1.bf16.msra.mxu0 %v1021
    %1363 = vmatprep.subr.bf16.mxu0 %v1026
    %1364 = vmatpush1.bf16.msra.mxu0 %v1025
    %1365 = vmatprep.subr.bf16.mxu0 %v1030
    %1366 = vmatpush1.bf16.msra.mxu0 %v1029
    %1367 = vmatprep.subr.bf16.mxu0 %v1034
    %1368 = vmatpush1.bf16.msra.mxu0 %v1033
    %1369 = vmatprep.subr.bf16.mxu0 %v1038
    %1370 = vmatpush1.bf16.msra.mxu0 %v1037
    %1371 = vmatprep.subr.bf16.mxu0 %v1042
    %1372 = vmatpush1.bf16.msra.mxu0 %v1041
    %1373 = vmatprep.subr.bf16.mxu0 %v1046
    %1374 = vmatpush1.bf16.msra.mxu0 %v1045
    %1375 = vmatprep.subr.bf16.mxu0 %v1050
    %1376 = vmatpush1.bf16.msra.mxu0 %v1049
    %1377 = vmatprep.subr.bf16.mxu0 %v1054
    %1378 = vmatpush1.bf16.msra.mxu0 %v1053
    %1379 = vmatprep.subr.bf16.mxu0 %v1058
    %1380 = vmatpush1.bf16.msra.mxu0 %v1057
    %1381 = vmatprep.subr.bf16.mxu0 %v1062
    %1382 = vmatpush1.bf16.msra.mxu0 %v1061
    %1383 = vmatprep.mubr.bf16.mxu0 %v65
    %1384 = vmatmul.mubr.bf16.gmra.mrb[0].mxu0 %v64
    %v1385 = vpop.f32.mrb[0].mxu0
    %v1386 = vadd.f32 %v1345, %v1385
    %v1387 = vpop.f32.mrb[0].mxu0
    %v1388 = vadd.f32 %v1347, %v1387
    %v1389 = vpop.f32.mrb[0].mxu0
    %v1390 = vpop.f32.mrb[0].mxu0
    %1391 = vdwg.mxu0
    %1392 = vmatprep.subr.bf16.mxu0 %v1066
    %1393 = vmatpush1.bf16.msra.mxu0 %v1065
    %1394 = vmatprep.subr.bf16.mxu0 0
    %1395 = vmatpush1.bf16.msra.mxu0 0
    %1396 = vmatprep.subr.bf16.mxu0 0
    %1397 = vmatpush1.bf16.msra.mxu0 0
    %1398 = vmatprep.subr.bf16.mxu0 0
    %1399 = vmatpush1.bf16.msra.mxu0 0
    %1400 = vmatprep.subr.bf16.mxu0 0
    %1401 = vmatpush1.bf16.msra.mxu0 0
    %1402 = vmatprep.subr.bf16.mxu0 0
    %1403 = vmatpush1.bf16.msra.mxu0 0
    %1404 = vmatprep.subr.bf16.mxu0 0
    %1405 = vmatpush1.bf16.msra.mxu0 0
    %1406 = vmatprep.subr.bf16.mxu0 0
    %1407 = vmatpush1.bf16.msra.mxu0 0
    %1408 = vmatprep.subr.bf16.mxu0 0
    %1409 = vmatpush1.bf16.msra.mxu0 0
    %1410 = vmatprep.subr.bf16.mxu0 0
    %1411 = vmatpush1.bf16.msra.mxu0 0
    %1412 = vmatprep.subr.bf16.mxu0 0
    %1413 = vmatpush1.bf16.msra.mxu0 0
    %1414 = vmatprep.subr.bf16.mxu0 0
    %1415 = vmatpush1.bf16.msra.mxu0 0
    %1416 = vmatprep.subr.bf16.mxu0 0
    %1417 = vmatpush1.bf16.msra.mxu0 0
    %1418 = vmatprep.subr.bf16.mxu0 0
    %1419 = vmatpush1.bf16.msra.mxu0 0
    %1420 = vmatprep.subr.bf16.mxu0 0
    %1421 = vmatpush1.bf16.msra.mxu0 0
    %1422 = vmatprep.subr.bf16.mxu0 0
    %1423 = vmatpush1.bf16.msra.mxu0 0
    %1424 = vmatprep.mubr.bf16.mxu0 0
    %1425 = vmatmul.mubr.bf16.gmra.mrb[0].mxu0 %v1267
    %v1426 = vpop.f32.mrb[0].mxu0
    %v1427 = vadd.f32 %v1386, %v1426
    %v1428 = vpop.f32.mrb[0].mxu0
    %v1429 = vadd.f32 %v1388, %v1428
    %v1430 = vpop.f32.mrb[0].mxu0
    %v1431 = vpop.f32.mrb[0].mxu0
    %1432 = vdwg.mxu0
    %1433 = vmatprep.subr.bf16.mxu0 %v876
    %1434 = vmatpush1.bf16.msra.mxu0 %v875
    %1435 = vmatprep.subr.bf16.mxu0 %v880
    %1436 = vmatpush1.bf16.msra.mxu0 %v879
    %1437 = vmatprep.subr.bf16.mxu0 %v884
    %1438 = vmatpush1.bf16.msra.mxu0 %v883
    %1439 = vmatprep.subr.bf16.mxu0 %v888
    %1440 = vmatpush1.bf16.msra.mxu0 %v887
    %1441 = vmatprep.subr.bf16.mxu0 %v892
    %1442 = vmatpush1.bf16.msra.mxu0 %v891
    %1443 = vmatprep.subr.bf16.mxu0 %v896
    %1444 = vmatpush1.bf16.msra.mxu0 %v895
    %1445 = vmatprep.subr.bf16.mxu0 %v900
    %1446 = vmatpush1.bf16.msra.mxu0 %v899
    %1447 = vmatprep.subr.bf16.mxu0 %v904
    %1448 = vmatpush1.bf16.msra.mxu0 %v903
    %1449 = vmatprep.subr.bf16.mxu0 %v908
    %1450 = vmatpush1.bf16.msra.mxu0 %v907
    %1451 = vmatprep.subr.bf16.mxu0 %v912
    %1452 = vmatpush1.bf16.msra.mxu0 %v911
    %1453 = vmatprep.subr.bf16.mxu0 %v916
    %1454 = vmatpush1.bf16.msra.mxu0 %v915
    %1455 = vmatprep.subr.bf16.mxu0 %v920
    %1456 = vmatpush1.bf16.msra.mxu0 %v919
    %1457 = vmatprep.subr.bf16.mxu0 %v924
    %1458 = vmatpush1.bf16.msra.mxu0 %v923
    %1459 = vmatprep.subr.bf16.mxu0 %v928
    %1460 = vmatpush1.bf16.msra.mxu0 %v927
    %1461 = vmatprep.subr.bf16.mxu0 %v932
    %1462 = vmatpush1.bf16.msra.mxu0 %v931
    %1463 = vmatprep.subr.bf16.mxu0 %v936
    %1464 = vmatpush1.bf16.msra.mxu0 %v935
    %1465 = vmatprep.mubr.bf16.mxu0 %v61
    %1466 = vmatmul.mubr.bf16.gmra.mrb[0].mxu0 %v60
    %v1467 = vpop.f32.mrb[0].mxu0
    %v1468 = vadd.f32 %v276, %v1467
    %v1469 = vpop.f32.mrb[0].mxu0
    %v1470 = vadd.f32 %v280, %v1469
    %v1471 = vpop.f32.mrb[0].mxu0
    %v1472 = vpop.f32.mrb[0].mxu0
    %1473 = vdwg.mxu0
    %1474 = vmatprep.subr.bf16.mxu0 %v940
    %1475 = vmatpush1.bf16.msra.mxu0 %v939
    %1476 = vmatprep.subr.bf16.mxu0 %v944
    %1477 = vmatpush1.bf16.msra.mxu0 %v943
    %1478 = vmatprep.subr.bf16.mxu0 %v948
    %1479 = vmatpush1.bf16.msra.mxu0 %v947
    %1480 = vmatprep.subr.bf16.mxu0 %v952
    %1481 = vmatpush1.bf16.msra.mxu0 %v951
    %1482 = vmatprep.subr.bf16.mxu0 %v956
    %1483 = vmatpush1.bf16.msra.mxu0 %v955
    %1484 = vmatprep.subr.bf16.mxu0 %v960
    %1485 = vmatpush1.bf16.msra.mxu0 %v959
    %1486 = vmatprep.subr.bf16.mxu0 %v964
    %1487 = vmatpush1.bf16.msra.mxu0 %v963
    %1488 = vmatprep.subr.bf16.mxu0 %v968
    %1489 = vmatpush1.bf16.msra.mxu0 %v967
    %1490 = vmatprep.subr.bf16.mxu0 %v972
    %1491 = vmatpush1.bf16.msra.mxu0 %v971
    %1492 = vmatprep.subr.bf16.mxu0 %v976
    %1493 = vmatpush1.bf16.msra.mxu0 %v975
    %1494 = vmatprep.subr.bf16.mxu0 %v980
    %1495 = vmatpush1.bf16.msra.mxu0 %v979
    %1496 = vmatprep.subr.bf16.mxu0 %v984
    %1497 = vmatpush1.bf16.msra.mxu0 %v983
    %1498 = vmatprep.subr.bf16.mxu0 %v988
    %1499 = vmatpush1.bf16.msra.mxu0 %v987
    %1500 = vmatprep.subr.bf16.mxu0 %v992
    %1501 = vmatpush1.bf16.msra.mxu0 %v991
    %1502 = vmatprep.subr.bf16.mxu0 %v996
    %1503 = vmatpush1.bf16.msra.mxu0 %v995
    %1504 = vmatprep.subr.bf16.mxu0 %v1000
    %1505 = vmatpush1.bf16.msra.mxu0 %v999
    %1506 = vmatprep.mubr.bf16.mxu0 %v63
    %1507 = vmatmul.mubr.bf16.gmra.mrb[0].mxu0 %v62
    %v1508 = vpop.f32.mrb[0].mxu0
    %v1509 = vadd.f32 %v1468, %v1508
    %v1510 = vpop.f32.mrb[0].mxu0
    %v1511 = vadd.f32 %v1470, %v1510
    %v1512 = vpop.f32.mrb[0].mxu0
    %v1513 = vpop.f32.mrb[0].mxu0
    %1514 = vdwg.mxu0
    %1515 = vmatprep.subr.bf16.mxu0 %v1004
    %1516 = vmatpush1.bf16.msra.mxu0 %v1003
    %1517 = vmatprep.subr.bf16.mxu0 %v1008
    %1518 = vmatpush1.bf16.msra.mxu0 %v1007
    %1519 = vmatprep.subr.bf16.mxu0 %v1012
    %1520 = vmatpush1.bf16.msra.mxu0 %v1011
    %1521 = vmatprep.subr.bf16.mxu0 %v1016
    %1522 = vmatpush1.bf16.msra.mxu0 %v1015
    %1523 = vmatprep.subr.bf16.mxu0 %v1020
    %1524 = vmatpush1.bf16.msra.mxu0 %v1019
    %1525 = vmatprep.subr.bf16.mxu0 %v1024
    %1526 = vmatpush1.bf16.msra.mxu0 %v1023
    %1527 = vmatprep.subr.bf16.mxu0 %v1028
    %1528 = vmatpush1.bf16.msra.mxu0 %v1027
    %1529 = vmatprep.subr.bf16.mxu0 %v1032
    %1530 = vmatpush1.bf16.msra.mxu0 %v1031
    %1531 = vmatprep.subr.bf16.mxu0 %v1036
    %1532 = vmatpush1.bf16.msra.mxu0 %v1035
    %1533 = vmatprep.subr.bf16.mxu0 %v1040
    %1534 = vmatpush1.bf16.msra.mxu0 %v1039
    %1535 = vmatprep.subr.bf16.mxu0 %v1044
    %1536 = vmatpush1.bf16.msra.mxu0 %v1043
    %1537 = vmatprep.subr.bf16.mxu0 %v1048
    %1538 = vmatpush1.bf16.msra.mxu0 %v1047
    %1539 = vmatprep.subr.bf16.mxu0 %v1052
    %1540 = vmatpush1.bf16.msra.mxu0 %v1051
    %1541 = vmatprep.subr.bf16.mxu0 %v1056
    %1542 = vmatpush1.bf16.msra.mxu0 %v1055
    %1543 = vmatprep.subr.bf16.mxu0 %v1060
    %1544 = vmatpush1.bf16.msra.mxu0 %v1059
    %1545 = vmatprep.subr.bf16.mxu0 %v1064
    %1546 = vmatpush1.bf16.msra.mxu0 %v1063
    %1547 = vmatprep.mubr.bf16.mxu0 %v65
    %1548 = vmatmul.mubr.bf16.gmra.mrb[0].mxu0 %v64
    %v1549 = vpop.f32.mrb[0].mxu0
    %v1550 = vadd.f32 %v1509, %v1549
    %v1551 = vpop.f32.mrb[0].mxu0
    %v1552 = vadd.f32 %v1511, %v1551
    %v1553 = vpop.f32.mrb[0].mxu0
    %v1554 = vpop.f32.mrb[0].mxu0
    %1555 = vdwg.mxu0
    %1556 = vmatprep.subr.bf16.mxu0 %v1068
    %1557 = vmatpush1.bf16.msra.mxu0 %v1067
    %1558 = vmatprep.subr.bf16.mxu0 0
    %1559 = vmatpush1.bf16.msra.mxu0 0
    %1560 = vmatprep.subr.bf16.mxu0 0
    %1561 = vmatpush1.bf16.msra.mxu0 0
    %1562 = vmatprep.subr.bf16.mxu0 0
    %1563 = vmatpush1.bf16.msra.mxu0 0
    %1564 = vmatprep.subr.bf16.mxu0 0
    %1565 = vmatpush1.bf16.msra.mxu0 0
    %1566 = vmatprep.subr.bf16.mxu0 0
    %1567 = vmatpush1.bf16.msra.mxu0 0
    %1568 = vmatprep.subr.bf16.mxu0 0
    %1569 = vmatpush1.bf16.msra.mxu0 0
    %1570 = vmatprep.subr.bf16.mxu0 0
    %1571 = vmatpush1.bf16.msra.mxu0 0
    %1572 = vmatprep.subr.bf16.mxu0 0
    %1573 = vmatpush1.bf16.msra.mxu0 0
    %1574 = vmatprep.subr.bf16.mxu0 0
    %1575 = vmatpush1.bf16.msra.mxu0 0
    %1576 = vmatprep.subr.bf16.mxu0 0
    %1577 = vmatpush1.bf16.msra.mxu0 0
    %1578 = vmatprep.subr.bf16.mxu0 0
    %1579 = vmatpush1.bf16.msra.mxu0 0
    %1580 = vmatprep.subr.bf16.mxu0 0
    %1581 = vmatpush1.bf16.msra.mxu0 0
    %1582 = vmatprep.subr.bf16.mxu0 0
    %1583 = vmatpush1.bf16.msra.mxu0 0
    %1584 = vmatprep.subr.bf16.mxu0 0
    %1585 = vmatpush1.bf16.msra.mxu0 0
    %1586 = vmatprep.subr.bf16.mxu0 0
    %1587 = vmatpush1.bf16.msra.mxu0 0
    %1588 = vmatprep.mubr.bf16.mxu0 0
    %1589 = vmatmul.mubr.bf16.gmra.mrb[0].mxu0 %v1267
    %v1590 = vpop.f32.mrb[0].mxu0
    %v1591 = vadd.f32 %v1550, %v1590
    %v1592 = vpop.f32.mrb[0].mxu0
    %v1593 = vadd.f32 %v1552, %v1592
    %v1594 = vpop.f32.mrb[0].mxu0
    %v1595 = vpop.f32.mrb[0].mxu0
    %1596 = vdwg.mxu0
    %v1597 = vmax.f32 %v1427, 0.0
    %v1598 = vmax.f32 %v1429, 0.0
    %v1599 = vmax.f32 %v1591, 0.0
    %v1600 = vmax.f32 %v1593, 0.0
    %v1601 = vpack.c.bf16 %v1597, %v1597
    %v1602 = vpack.c.bf16 %v1598, %v1598
    %v1603 = vpack.c.bf16 %v1599, %v1599
    %v1604 = vpack.c.bf16 %v1600, %v1600
    %v1605 = vld [vmem:[%s3] sm:$0xff]
    %v1606 = vld [vmem:[%s3 + $0x8] sm:$0xff]
    %v1607 = vld [vmem:[%s3 + $0x10] sm:$0xff]
    %v1608 = vld [vmem:[%s3 + $0x18] sm:$0xff]
    %v1609 = vld [vmem:[%s3 + $0x20] sm:$0xff]
    %v1610 = vld [vmem:[%s3 + $0x28] sm:$0xff]
    %v1611 = vld [vmem:[%s3 + $0x30] sm:$0xff]
    %v1612 = vld [vmem:[%s3 + $0x38] sm:$0xff]
    %v1613 = vld [vmem:[%s3 + $0x40] sm:$0xff]
    %v1614 = vld [vmem:[%s3 + $0x48] sm:$0xff]
    %v1615 = vld [vmem:[%s3 + $0x50] sm:$0xff]
    %v1616 = vld [vmem:[%s3 + $0x58] sm:$0xff]
    %v1617 = vld [vmem:[%s3 + $0x60] sm:$0xff]
    %v1618 = vld [vmem:[%s3 + $0x68] sm:$0xff]
    %v1619 = vld [vmem:[%s3 + $0x70] sm:$0xff]
    %v1620 = vld [vmem:[%s3 + $0x78] sm:$0xff]
    %v1621 = vld [vmem:[%s3 + $0x80] sm:$0xff]
    %v1622 = vld [vmem:[%s3 + $0x88] sm:$0xff]
    %v1623 = vld [vmem:[%s3 + $0x90] sm:$0xff]
    %v1624 = vld [vmem:[%s3 + $0x98] sm:$0xff]
    %v1625 = vld [vmem:[%s3 + $0xa0] sm:$0xff]
    %v1626 = vld [vmem:[%s3 + $0xa8] sm:$0xff]
    %v1627 = vld [vmem:[%s3 + $0xb0] sm:$0xff]
    %v1628 = vld [vmem:[%s3 + $0xb8] sm:$0xff]
    %v1629 = vld [vmem:[%s3 + $0xc0] sm:$0xff]
    %v1630 = vld [vmem:[%s3 + $0xc8] sm:$0xff]
    %v1631 = vld [vmem:[%s3 + $0xd0] sm:$0xff]
    %v1632 = vld [vmem:[%s3 + $0xd8] sm:$0xff]
    %v1633 = vld [vmem:[%s3 + $0xe0] sm:$0xff]
    %v1634 = vld [vmem:[%s3 + $0xe8] sm:$0xff]
    %v1635 = vld [vmem:[%s3 + $0xf0] sm:$0xff]
    %v1636 = vld [vmem:[%s3 + $0xf8] sm:$0xff]
    %v1637 = vld [vmem:[%s3 + $0x100] sm:$0xff]
    %v1638 = vld [vmem:[%s3 + $0x108] sm:$0xff]
    %v1639 = vld [vmem:[%s3 + $0x110] sm:$0xff]
    %v1640 = vld [vmem:[%s3 + $0x118] sm:$0xff]
    %v1641 = vld [vmem:[%s3 + $0x120] sm:$0xff]
    %v1642 = vld [vmem:[%s3 + $0x128] sm:$0xff]
    %v1643 = vld [vmem:[%s3 + $0x130] sm:$0xff]
    %v1644 = vld [vmem:[%s3 + $0x138] sm:$0xff]
    %v1645 = vld [vmem:[%s3 + $0x140] sm:$0xff]
    %v1646 = vld [vmem:[%s3 + $0x148] sm:$0xff]
    %v1647 = vld [vmem:[%s3 + $0x150] sm:$0xff]
    %v1648 = vld [vmem:[%s3 + $0x158] sm:$0xff]
    %v1649 = vld [vmem:[%s3 + $0x160] sm:$0xff]
    %v1650 = vld [vmem:[%s3 + $0x168] sm:$0xff]
    %v1651 = vld [vmem:[%s3 + $0x170] sm:$0xff]
    %v1652 = vld [vmem:[%s3 + $0x178] sm:$0xff]
    %v1653 = vld [vmem:[%s3 + $0x180] sm:$0xff]
    %v1654 = vld [vmem:[%s3 + $0x188] sm:$0xff]
    %v1655 = vld [vmem:[%s3 + $0x190] sm:$0xff]
    %v1656 = vld [vmem:[%s3 + $0x198] sm:$0xff]
    %v1657 = vld [vmem:[%s3 + $0x1a0] sm:$0xff]
    %v1658 = vld [vmem:[%s3 + $0x1a8] sm:$0xff]
    %v1659 = vld [vmem:[%s3 + $0x1b0] sm:$0xff]
    %v1660 = vld [vmem:[%s3 + $0x1b8] sm:$0xff]
    %v1661 = vld [vmem:[%s3 + $0x1c0] sm:$0xff]
    %v1662 = vld [vmem:[%s3 + $0x1c8] sm:$0xff]
    %v1663 = vld [vmem:[%s3 + $0x1d0] sm:$0xff]
    %v1664 = vld [vmem:[%s3 + $0x1d8] sm:$0xff]
    %v1665 = vld [vmem:[%s3 + $0x1e0] sm:$0xff]
    %v1666 = vld [vmem:[%s3 + $0x1e8] sm:$0xff]
    %v1667 = vld [vmem:[%s3 + $0x1f0] sm:$0xff]
    %v1668 = vld [vmem:[%s3 + $0x1f8] sm:$0xff]
    %v1669 = vld [vmem:[%s4] sm:$0x3]
    %v1671 = vlaneseq
    %v1672 = vshrl.u32 %v1671, 7
    %v1673 = vsub.s32 0, %v1672
    %v1674 = vrot.slane %v1669, %v1673
    %v1675 = vlaneseq
    %v1676 = vshrl.u32 %v1675, 7
    %v1677 = vsub.s32 1, %v1676
    %v1678 = vrot.slane %v1669, %v1677
    %v1745 = vunpack.c.l.b16 %v1605
    %v1746 = vunpack.c.h.b16 %v1605
    %v1747 = vunpack.c.l.b16 %v1606
    %v1748 = vunpack.c.h.b16 %v1606
    %v1749 = vunpack.c.l.b16 %v1607
    %v1750 = vunpack.c.h.b16 %v1607
    %v1751 = vunpack.c.l.b16 %v1608
    %v1752 = vunpack.c.h.b16 %v1608
    %v1753 = vunpack.c.l.b16 %v1609
    %v1754 = vunpack.c.h.b16 %v1609
    %v1755 = vunpack.c.l.b16 %v1610
    %v1756 = vunpack.c.h.b16 %v1610
    %v1757 = vunpack.c.l.b16 %v1611
    %v1758 = vunpack.c.h.b16 %v1611
    %v1759 = vunpack.c.l.b16 %v1612
    %v1760 = vunpack.c.h.b16 %v1612
    %v1761 = vunpack.c.l.b16 %v1613
    %v1762 = vunpack.c.h.b16 %v1613
    %v1763 = vunpack.c.l.b16 %v1614
    %v1764 = vunpack.c.h.b16 %v1614
    %v1765 = vunpack.c.l.b16 %v1615
    %v1766 = vunpack.c.h.b16 %v1615
    %v1767 = vunpack.c.l.b16 %v1616
    %v1768 = vunpack.c.h.b16 %v1616
    %v1769 = vunpack.c.l.b16 %v1617
    %v1770 = vunpack.c.h.b16 %v1617
    %v1771 = vunpack.c.l.b16 %v1618
    %v1772 = vunpack.c.h.b16 %v1618
    %v1773 = vunpack.c.l.b16 %v1619
    %v1774 = vunpack.c.h.b16 %v1619
    %v1775 = vunpack.c.l.b16 %v1620
    %v1776 = vunpack.c.h.b16 %v1620
    %v1777 = vunpack.c.l.b16 %v1621
    %v1778 = vunpack.c.h.b16 %v1621
    %v1779 = vunpack.c.l.b16 %v1622
    %v1780 = vunpack.c.h.b16 %v1622
    %v1781 = vunpack.c.l.b16 %v1623
    %v1782 = vunpack.c.h.b16 %v1623
    %v1783 = vunpack.c.l.b16 %v1624
    %v1784 = vunpack.c.h.b16 %v1624
    %v1785 = vunpack.c.l.b16 %v1625
    %v1786 = vunpack.c.h.b16 %v1625
    %v1787 = vunpack.c.l.b16 %v1626
    %v1788 = vunpack.c.h.b16 %v1626
    %v1789 = vunpack.c.l.b16 %v1627
    %v1790 = vunpack.c.h.b16 %v1627
    %v1791 = vunpack.c.l.b16 %v1628
    %v1792 = vunpack.c.h.b16 %v1628
    %v1793 = vunpack.c.l.b16 %v1629
    %v1794 = vunpack.c.h.b16 %v1629
    %v1795 = vunpack.c.l.b16 %v1630
    %v1796 = vunpack.c.h.b16 %v1630
    %v1797 = vunpack.c.l.b16 %v1631
    %v1798 = vunpack.c.h.b16 %v1631
    %v1799 = vunpack.c.l.b16 %v1632
    %v1800 = vunpack.c.h.b16 %v1632
    %v1801 = vunpack.c.l.b16 %v1633
    %v1802 = vunpack.c.h.b16 %v1633
    %v1803 = vunpack.c.l.b16 %v1634
    %v1804 = vunpack.c.h.b16 %v1634
    %v1805 = vunpack.c.l.b16 %v1635
    %v1806 = vunpack.c.h.b16 %v1635
    %v1807 = vunpack.c.l.b16 %v1636
    %v1808 = vunpack.c.h.b16 %v1636
    %v1809 = vunpack.c.l.b16 %v1637
    %v1810 = vunpack.c.h.b16 %v1637
    %v1811 = vunpack.c.l.b16 %v1638
    %v1812 = vunpack.c.h.b16 %v1638
    %v1813 = vunpack.c.l.b16 %v1639
    %v1814 = vunpack.c.h.b16 %v1639
    %v1815 = vunpack.c.l.b16 %v1640
    %v1816 = vunpack.c.h.b16 %v1640
    %v1817 = vunpack.c.l.b16 %v1641
    %v1818 = vunpack.c.h.b16 %v1641
    %v1819 = vunpack.c.l.b16 %v1642
    %v1820 = vunpack.c.h.b16 %v1642
    %v1821 = vunpack.c.l.b16 %v1643
    %v1822 = vunpack.c.h.b16 %v1643
    %v1823 = vunpack.c.l.b16 %v1644
    %v1824 = vunpack.c.h.b16 %v1644
    %v1825 = vunpack.c.l.b16 %v1645
    %v1826 = vunpack.c.h.b16 %v1645
    %v1827 = vunpack.c.l.b16 %v1646
    %v1828 = vunpack.c.h.b16 %v1646
    %v1829 = vunpack.c.l.b16 %v1647
    %v1830 = vunpack.c.h.b16 %v1647
    %v1831 = vunpack.c.l.b16 %v1648
    %v1832 = vunpack.c.h.b16 %v1648
    %v1833 = vunpack.c.l.b16 %v1649
    %v1834 = vunpack.c.h.b16 %v1649
    %v1835 = vunpack.c.l.b16 %v1650
    %v1836 = vunpack.c.h.b16 %v1650
    %v1837 = vunpack.c.l.b16 %v1651
    %v1838 = vunpack.c.h.b16 %v1651
    %v1839 = vunpack.c.l.b16 %v1652
    %v1840 = vunpack.c.h.b16 %v1652
    %v1841 = vunpack.c.l.b16 %v1653
    %v1842 = vunpack.c.h.b16 %v1653
    %v1843 = vunpack.c.l.b16 %v1654
    %v1844 = vunpack.c.h.b16 %v1654
    %v1845 = vunpack.c.l.b16 %v1655
    %v1846 = vunpack.c.h.b16 %v1655
    %v1847 = vunpack.c.l.b16 %v1656
    %v1848 = vunpack.c.h.b16 %v1656
    %v1849 = vunpack.c.l.b16 %v1657
    %v1850 = vunpack.c.h.b16 %v1657
    %v1851 = vunpack.c.l.b16 %v1658
    %v1852 = vunpack.c.h.b16 %v1658
    %v1853 = vunpack.c.l.b16 %v1659
    %v1854 = vunpack.c.h.b16 %v1659
    %v1855 = vunpack.c.l.b16 %v1660
    %v1856 = vunpack.c.h.b16 %v1660
    %v1857 = vunpack.c.l.b16 %v1661
    %v1858 = vunpack.c.h.b16 %v1661
    %v1859 = vunpack.c.l.b16 %v1662
    %v1860 = vunpack.c.h.b16 %v1662
    %v1861 = vunpack.c.l.b16 %v1663
    %v1862 = vunpack.c.h.b16 %v1663
    %v1863 = vunpack.c.l.b16 %v1664
    %v1864 = vunpack.c.h.b16 %v1664
    %v1865 = vunpack.c.l.b16 %v1665
    %v1866 = vunpack.c.h.b16 %v1665
    %v1867 = vunpack.c.l.b16 %v1666
    %v1868 = vunpack.c.h.b16 %v1666
    %v1869 = vunpack.c.l.b16 %v1667
    %v1870 = vunpack.c.h.b16 %v1667
    %v1871 = vunpack.c.l.b16 %v1668
    %v1872 = vunpack.c.h.b16 %v1668
    %v1873 = vpack.c.b16 %v1747, %v1745
    %v1874 = vpack.c.b16 %v1748, %v1746
    %v1875 = vpack.c.b16 %v1751, %v1749
    %v1876 = vpack.c.b16 %v1752, %v1750
    %v1877 = vpack.c.b16 %v1755, %v1753
    %v1878 = vpack.c.b16 %v1756, %v1754
    %v1879 = vpack.c.b16 %v1759, %v1757
    %v1880 = vpack.c.b16 %v1760, %v1758
    %v1881 = vpack.c.b16 %v1763, %v1761
    %v1882 = vpack.c.b16 %v1764, %v1762
    %v1883 = vpack.c.b16 %v1767, %v1765
    %v1884 = vpack.c.b16 %v1768, %v1766
    %v1885 = vpack.c.b16 %v1771, %v1769
    %v1886 = vpack.c.b16 %v1772, %v1770
    %v1887 = vpack.c.b16 %v1775, %v1773
    %v1888 = vpack.c.b16 %v1776, %v1774
    %v1889 = vpack.c.b16 %v1779, %v1777
    %v1890 = vpack.c.b16 %v1780, %v1778
    %v1891 = vpack.c.b16 %v1783, %v1781
    %v1892 = vpack.c.b16 %v1784, %v1782
    %v1893 = vpack.c.b16 %v1787, %v1785
    %v1894 = vpack.c.b16 %v1788, %v1786
    %v1895 = vpack.c.b16 %v1791, %v1789
    %v1896 = vpack.c.b16 %v1792, %v1790
    %v1897 = vpack.c.b16 %v1795, %v1793
    %v1898 = vpack.c.b16 %v1796, %v1794
    %v1899 = vpack.c.b16 %v1799, %v1797
    %v1900 = vpack.c.b16 %v1800, %v1798
    %v1901 = vpack.c.b16 %v1803, %v1801
    %v1902 = vpack.c.b16 %v1804, %v1802
    %v1903 = vpack.c.b16 %v1807, %v1805
    %v1904 = vpack.c.b16 %v1808, %v1806
    %v1905 = vpack.c.b16 %v1811, %v1809
    %v1906 = vpack.c.b16 %v1812, %v1810
    %v1907 = vpack.c.b16 %v1815, %v1813
    %v1908 = vpack.c.b16 %v1816, %v1814
    %v1909 = vpack.c.b16 %v1819, %v1817
    %v1910 = vpack.c.b16 %v1820, %v1818
    %v1911 = vpack.c.b16 %v1823, %v1821
    %v1912 = vpack.c.b16 %v1824, %v1822
    %v1913 = vpack.c.b16 %v1827, %v1825
    %v1914 = vpack.c.b16 %v1828, %v1826
    %v1915 = vpack.c.b16 %v1831, %v1829
    %v1916 = vpack.c.b16 %v1832, %v1830
    %v1917 = vpack.c.b16 %v1835, %v1833
    %v1918 = vpack.c.b16 %v1836, %v1834
    %v1919 = vpack.c.b16 %v1839, %v1837
    %v1920 = vpack.c.b16 %v1840, %v1838
    %v1921 = vpack.c.b16 %v1843, %v1841
    %v1922 = vpack.c.b16 %v1844, %v1842
    %v1923 = vpack.c.b16 %v1847, %v1845
    %v1924 = vpack.c.b16 %v1848, %v1846
    %v1925 = vpack.c.b16 %v1851, %v1849
    %v1926 = vpack.c.b16 %v1852, %v1850
    %v1927 = vpack.c.b16 %v1855, %v1853
    %v1928 = vpack.c.b16 %v1856, %v1854
    %v1929 = vpack.c.b16 %v1859, %v1857
    %v1930 = vpack.c.b16 %v1860, %v1858
    %v1931 = vpack.c.b16 %v1863, %v1861
    %v1932 = vpack.c.b16 %v1864, %v1862
    %v1933 = vpack.c.b16 %v1867, %v1865
    %v1934 = vpack.c.b16 %v1868, %v1866
    %v1935 = vpack.c.b16 %v1871, %v1869
    %v1936 = vpack.c.b16 %v1872, %v1870
    %2001 = vmatprep.subr.bf16.mxu0 %v1874
    %2002 = vmatpush1.bf16.msra.mxu0 %v1873
    %2003 = vmatprep.subr.bf16.mxu0 %v1876
    %2004 = vmatpush1.bf16.msra.mxu0 %v1875
    %2005 = vmatprep.subr.bf16.mxu0 %v1878
    %2006 = vmatpush1.bf16.msra.mxu0 %v1877
    %2007 = vmatprep.subr.bf16.mxu0 %v1880
    %2008 = vmatpush1.bf16.msra.mxu0 %v1879
    %2009 = vmatprep.subr.bf16.mxu0 %v1882
    %2010 = vmatpush1.bf16.msra.mxu0 %v1881
    %2011 = vmatprep.subr.bf16.mxu0 %v1884
    %2012 = vmatpush1.bf16.msra.mxu0 %v1883
    %2013 = vmatprep.subr.bf16.mxu0 %v1886
    %2014 = vmatpush1.bf16.msra.mxu0 %v1885
    %2015 = vmatprep.subr.bf16.mxu0 %v1888
    %2016 = vmatpush1.bf16.msra.mxu0 %v1887
    %2017 = vmatprep.subr.bf16.mxu0 %v1890
    %2018 = vmatpush1.bf16.msra.mxu0 %v1889
    %2019 = vmatprep.subr.bf16.mxu0 %v1892
    %2020 = vmatpush1.bf16.msra.mxu0 %v1891
    %2021 = vmatprep.subr.bf16.mxu0 %v1894
    %2022 = vmatpush1.bf16.msra.mxu0 %v1893
    %2023 = vmatprep.subr.bf16.mxu0 %v1896
    %2024 = vmatpush1.bf16.msra.mxu0 %v1895
    %2025 = vmatprep.subr.bf16.mxu0 %v1898
    %2026 = vmatpush1.bf16.msra.mxu0 %v1897
    %2027 = vmatprep.subr.bf16.mxu0 %v1900
    %2028 = vmatpush1.bf16.msra.mxu0 %v1899
    %2029 = vmatprep.subr.bf16.mxu0 %v1902
    %2030 = vmatpush1.bf16.msra.mxu0 %v1901
    %2031 = vmatprep.subr.bf16.mxu0 %v1904
    %2032 = vmatpush1.bf16.msra.mxu0 %v1903
    %2033 = vmatprep.mubr.bf16.mxu0 %v1602
    %2034 = vmatmul.mubr.bf16.gmra.mrb[0].mxu0 %v1601
    %v2035 = vpop.f32.mrb[0].mxu0
    %v2036 = vadd.f32 %v1674, %v2035
    %v2037 = vpop.f32.mrb[0].mxu0
    %v2038 = vadd.f32 %v1678, %v2037
    %v2039 = vpop.f32.mrb[0].mxu0
    %v2040 = vpop.f32.mrb[0].mxu0
    %2041 = vdwg.mxu0
    %2042 = vmatprep.subr.bf16.mxu0 %v1906
    %2043 = vmatpush1.bf16.msra.mxu0 %v1905
    %2044 = vmatprep.subr.bf16.mxu0 %v1908
    %2045 = vmatpush1.bf16.msra.mxu0 %v1907
    %2046 = vmatprep.subr.bf16.mxu0 %v1910
    %2047 = vmatpush1.bf16.msra.mxu0 %v1909
    %2048 = vmatprep.subr.bf16.mxu0 %v1912
    %2049 = vmatpush1.bf16.msra.mxu0 %v1911
    %2050 = vmatprep.subr.bf16.mxu0 %v1914
    %2051 = vmatpush1.bf16.msra.mxu0 %v1913
    %2052 = vmatprep.subr.bf16.mxu0 %v1916
    %2053 = vmatpush1.bf16.msra.mxu0 %v1915
    %2054 = vmatprep.subr.bf16.mxu0 %v1918
    %2055 = vmatpush1.bf16.msra.mxu0 %v1917
    %2056 = vmatprep.subr.bf16.mxu0 %v1920
    %2057 = vmatpush1.bf16.msra.mxu0 %v1919
    %2058 = vmatprep.subr.bf16.mxu0 %v1922
    %2059 = vmatpush1.bf16.msra.mxu0 %v1921
    %2060 = vmatprep.subr.bf16.mxu0 %v1924
    %2061 = vmatpush1.bf16.msra.mxu0 %v1923
    %2062 = vmatprep.subr.bf16.mxu0 %v1926
    %2063 = vmatpush1.bf16.msra.mxu0 %v1925
    %2064 = vmatprep.subr.bf16.mxu0 %v1928
    %2065 = vmatpush1.bf16.msra.mxu0 %v1927
    %2066 = vmatprep.subr.bf16.mxu0 %v1930
    %2067 = vmatpush1.bf16.msra.mxu0 %v1929
    %2068 = vmatprep.subr.bf16.mxu0 %v1932
    %2069 = vmatpush1.bf16.msra.mxu0 %v1931
    %2070 = vmatprep.subr.bf16.mxu0 %v1934
    %2071 = vmatpush1.bf16.msra.mxu0 %v1933
    %2072 = vmatprep.subr.bf16.mxu0 %v1936
    %2073 = vmatpush1.bf16.msra.mxu0 %v1935
    %2074 = vmatprep.mubr.bf16.mxu0 %v1604
    %2075 = vmatmul.mubr.bf16.gmra.mrb[0].mxu0 %v1603
    %v2076 = vpop.f32.mrb[0].mxu0
    %v2077 = vadd.f32 %v2036, %v2076
    %v2078 = vpop.f32.mrb[0].mxu0
    %v2079 = vadd.f32 %v2038, %v2078
    %v2080 = vpop.f32.mrb[0].mxu0
    %v2081 = vpop.f32.mrb[0].mxu0
    %2082 = vdwg.mxu0
    %v2083 = vmax.f32 %v2077, 0.0
    %v2084 = vmax.f32 %v2079, 0.0
    %v2085 = vpack.c.bf16 %v2083, %v2083
    %v2086 = vpack.c.bf16 %v2084, %v2084
    %v2087 = vld [vmem:[%s5] sm:$0xf]
    %v2088 = vld [vmem:[%s5 + $0x4] sm:$0xf]
    %v2089 = vld [vmem:[%s5 + $0x8] sm:$0xf]
    %v2090 = vld [vmem:[%s5 + $0xc] sm:$0xf]
    %v2091 = vld [vmem:[%s5 + $0x10] sm:$0xf]
    %v2092 = vld [vmem:[%s5 + $0x14] sm:$0xf]
    %v2093 = vld [vmem:[%s5 + $0x18] sm:$0xf]
    %v2094 = vld [vmem:[%s5 + $0x1c] sm:$0xf]
    %v2095 = vld [vmem:[%s5 + $0x20] sm:$0xf]
    %v2096 = vld [vmem:[%s5 + $0x24] sm:$0xf]
    %v2097 = vld [vmem:[%s5 + $0x28] sm:$0xf]
    %v2098 = vld [vmem:[%s5 + $0x2c] sm:$0xf]
    %v2099 = vld [vmem:[%s5 + $0x30] sm:$0xf]
    %v2100 = vld [vmem:[%s5 + $0x34] sm:$0xf]
    %v2101 = vld [vmem:[%s5 + $0x38] sm:$0xf]
    %v2102 = vld [vmem:[%s5 + $0x3c] sm:$0xf]
    %v2103 = vld [vmem:[%s5 + $0x40] sm:$0xf]
    %v2104 = vld [vmem:[%s5 + $0x44] sm:$0xf]
    %v2105 = vld [vmem:[%s5 + $0x48] sm:$0xf]
    %v2106 = vld [vmem:[%s5 + $0x4c] sm:$0xf]
    %v2107 = vld [vmem:[%s5 + $0x50] sm:$0xf]
    %v2108 = vld [vmem:[%s5 + $0x54] sm:$0xf]
    %v2109 = vld [vmem:[%s5 + $0x58] sm:$0xf]
    %v2110 = vld [vmem:[%s5 + $0x5c] sm:$0xf]
    %v2111 = vld [vmem:[%s5 + $0x60] sm:$0xf]
    %v2112 = vld [vmem:[%s5 + $0x64] sm:$0xf]
    %v2113 = vld [vmem:[%s5 + $0x68] sm:$0xf]
    %v2114 = vld [vmem:[%s5 + $0x6c] sm:$0xf]
    %v2115 = vld [vmem:[%s5 + $0x70] sm:$0xf]
    %v2116 = vld [vmem:[%s5 + $0x74] sm:$0xf]
    %v2117 = vld [vmem:[%s5 + $0x78] sm:$0xf]
    %v2118 = vld [vmem:[%s5 + $0x7c] sm:$0xf]
    %v2119 = vld [vmem:[%s6] sm:$0x1]
    %v2121 = vlaneseq
    %v2122 = vshrl.u32 %v2121, 7
    %v2123 = vsub.s32 0, %v2122
    %v2124 = vrot.slane %v2119, %v2123
    %v2158 = vunpack.c.l.b16 %v2087
    %v2159 = vunpack.c.l.b16 %v2088
    %v2160 = vunpack.c.l.b16 %v2089
    %v2161 = vunpack.c.l.b16 %v2090
    %v2162 = vunpack.c.l.b16 %v2091
    %v2163 = vunpack.c.l.b16 %v2092
    %v2164 = vunpack.c.l.b16 %v2093
    %v2165 = vunpack.c.l.b16 %v2094
    %v2166 = vunpack.c.l.b16 %v2095
    %v2167 = vunpack.c.l.b16 %v2096
    %v2168 = vunpack.c.l.b16 %v2097
    %v2169 = vunpack.c.l.b16 %v2098
    %v2170 = vunpack.c.l.b16 %v2099
    %v2171 = vunpack.c.l.b16 %v2100
    %v2172 = vunpack.c.l.b16 %v2101
    %v2173 = vunpack.c.l.b16 %v2102
    %v2174 = vunpack.c.l.b16 %v2103
    %v2175 = vunpack.c.l.b16 %v2104
    %v2176 = vunpack.c.l.b16 %v2105
    %v2177 = vunpack.c.l.b16 %v2106
    %v2178 = vunpack.c.l.b16 %v2107
    %v2179 = vunpack.c.l.b16 %v2108
    %v2180 = vunpack.c.l.b16 %v2109
    %v2181 = vunpack.c.l.b16 %v2110
    %v2182 = vunpack.c.l.b16 %v2111
    %v2183 = vunpack.c.l.b16 %v2112
    %v2184 = vunpack.c.l.b16 %v2113
    %v2185 = vunpack.c.l.b16 %v2114
    %v2186 = vunpack.c.l.b16 %v2115
    %v2187 = vunpack.c.l.b16 %v2116
    %v2188 = vunpack.c.l.b16 %v2117
    %v2189 = vunpack.c.l.b16 %v2118
    %v2190 = vpack.c.b16 %v2159, %v2158
    %v2191 = vpack.c.b16 %v2161, %v2160
    %v2192 = vpack.c.b16 %v2163, %v2162
    %v2193 = vpack.c.b16 %v2165, %v2164
    %v2194 = vpack.c.b16 %v2167, %v2166
    %v2195 = vpack.c.b16 %v2169, %v2168
    %v2196 = vpack.c.b16 %v2171, %v2170
    %v2197 = vpack.c.b16 %v2173, %v2172
    %v2198 = vpack.c.b16 %v2175, %v2174
    %v2199 = vpack.c.b16 %v2177, %v2176
    %v2200 = vpack.c.b16 %v2179, %v2178
    %v2201 = vpack.c.b16 %v2181, %v2180
    %v2202 = vpack.c.b16 %v2183, %v2182
    %v2203 = vpack.c.b16 %v2185, %v2184
    %v2204 = vpack.c.b16 %v2187, %v2186
    %v2205 = vpack.c.b16 %v2189, %v2188
    %2222 = vmatprep.subr.bf16.mxu0 0
    %2223 = vmatpush1.bf16.msra.mxu0 %v2190
    %2224 = vmatprep.subr.bf16.mxu0 0
    %2225 = vmatpush1.bf16.msra.mxu0 %v2191
    %2226 = vmatprep.subr.bf16.mxu0 0
    %2227 = vmatpush1.bf16.msra.mxu0 %v2192
    %2228 = vmatprep.subr.bf16.mxu0 0
    %2229 = vmatpush1.bf16.msra.mxu0 %v2193
    %2230 = vmatprep.subr.bf16.mxu0 0
    %2231 = vmatpush1.bf16.msra.mxu0 %v2194
    %2232 = vmatprep.subr.bf16.mxu0 0
    %2233 = vmatpush1.bf16.msra.mxu0 %v2195
    %2234 = vmatprep.subr.bf16.mxu0 0
    %2235 = vmatpush1.bf16.msra.mxu0 %v2196
    %2236 = vmatprep.subr.bf16.mxu0 0
    %2237 = vmatpush1.bf16.msra.mxu0 %v2197
    %2238 = vmatprep.subr.bf16.mxu0 0
    %2239 = vmatpush1.bf16.msra.mxu0 %v2198
    %2240 = vmatprep.subr.bf16.mxu0 0
    %2241 = vmatpush1.bf16.msra.mxu0 %v2199
    %2242 = vmatprep.subr.bf16.mxu0 0
    %2243 = vmatpush1.bf16.msra.mxu0 %v2200
    %2244 = vmatprep.subr.bf16.mxu0 0
    %2245 = vmatpush1.bf16.msra.mxu0 %v2201
    %2246 = vmatprep.subr.bf16.mxu0 0
    %2247 = vmatpush1.bf16.msra.mxu0 %v2202
    %2248 = vmatprep.subr.bf16.mxu0 0
    %2249 = vmatpush1.bf16.msra.mxu0 %v2203
    %2250 = vmatprep.subr.bf16.mxu0 0
    %2251 = vmatpush1.bf16.msra.mxu0 %v2204
    %2252 = vmatprep.subr.bf16.mxu0 0
    %2253 = vmatpush1.bf16.msra.mxu0 %v2205
    %2254 = vmatprep.mubr.bf16.mxu0 %v2086
    %2255 = vmatmul.mubr.bf16.gmra.mrb[0].mxu0 %v2085
    %v2256 = vpop.f32.mrb[0].mxu0
    %v2257 = vadd.f32 %v2124, %v2256
    %v2258 = vpop.f32.mrb[0].mxu0
    %v2259 = vpop.f32.mrb[0].mxu0
    %v2260 = vpop.f32.mrb[0].mxu0
    %2261 = vdwg.mxu0
    %v2262 = vmax.f32 %v2257, 0.0
    %v2263 = vpack.c.bf16 %v2262, %v2262
    %v2264 = vld [vmem:[%s7] sm:$0xf]
    %v2265 = vld [vmem:[%s7 + $0x4] sm:$0xf]
    %v2266 = vld [vmem:[%s7 + $0x8] sm:$0xf]
    %v2267 = vld [vmem:[%s7 + $0xc] sm:$0xf]
    %v2268 = vld [vmem:[%s7 + $0x10] sm:$0xf]
    %v2269 = vld [vmem:[%s7 + $0x14] sm:$0xf]
    %v2270 = vld [vmem:[%s7 + $0x18] sm:$0xf]
    %v2271 = vld [vmem:[%s7 + $0x1c] sm:$0xf]
    %v2272 = vld [vmem:[%s7 + $0x20] sm:$0xf]
    %v2273 = vld [vmem:[%s7 + $0x24] sm:$0xf]
    %v2274 = vld [vmem:[%s7 + $0x28] sm:$0xf]
    %v2275 = vld [vmem:[%s7 + $0x2c] sm:$0xf]
    %v2276 = vld [vmem:[%s7 + $0x30] sm:$0xf]
    %v2277 = vld [vmem:[%s7 + $0x34] sm:$0xf]
    %v2278 = vld [vmem:[%s7 + $0x38] sm:$0xf]
    %v2279 = vld [vmem:[%s7 + $0x3c] sm:$0xf]
    %v2280 = vld [vmem:[%s8] sm:$0x1]
    %v2282 = vlaneseq
    %v2283 = vshrl.u32 %v2282, 7
    %v2284 = vsub.s32 0, %v2283
    %v2285 = vrot.slane %v2280, %v2284
    %v2303 = vunpack.c.l.b16 %v2264
    %v2304 = vunpack.c.l.b16 %v2265
    %v2305 = vunpack.c.l.b16 %v2266
    %v2306 = vunpack.c.l.b16 %v2267
    %v2307 = vunpack.c.l.b16 %v2268
    %v2308 = vunpack.c.l.b16 %v2269
    %v2309 = vunpack.c.l.b16 %v2270
    %v2310 = vunpack.c.l.b16 %v2271
    %v2311 = vunpack.c.l.b16 %v2272
    %v2312 = vunpack.c.l.b16 %v2273
    %v2313 = vunpack.c.l.b16 %v2274
    %v2314 = vunpack.c.l.b16 %v2275
    %v2315 = vunpack.c.l.b16 %v2276
    %v2316 = vunpack.c.l.b16 %v2277
    %v2317 = vunpack.c.l.b16 %v2278
    %v2318 = vunpack.c.l.b16 %v2279
    %v2319 = vpack.c.b16 %v2304, %v2303
    %v2320 = vpack.c.b16 %v2306, %v2305
    %v2321 = vpack.c.b16 %v2308, %v2307
    %v2322 = vpack.c.b16 %v2310, %v2309
    %v2323 = vpack.c.b16 %v2312, %v2311
    %v2324 = vpack.c.b16 %v2314, %v2313
    %v2325 = vpack.c.b16 %v2316, %v2315
    %v2326 = vpack.c.b16 %v2318, %v2317
    %2335 = vmatprep.subr.bf16.mxu0 0
    %2336 = vmatpush1.bf16.msra.mxu0 %v2319
    %2337 = vmatprep.subr.bf16.mxu0 0
    %2338 = vmatpush1.bf16.msra.mxu0 %v2320
    %2339 = vmatprep.subr.bf16.mxu0 0
    %2340 = vmatpush1.bf16.msra.mxu0 %v2321
    %2341 = vmatprep.subr.bf16.mxu0 0
    %2342 = vmatpush1.bf16.msra.mxu0 %v2322
    %2343 = vmatprep.subr.bf16.mxu0 0
    %2344 = vmatpush1.bf16.msra.mxu0 %v2323
    %2345 = vmatprep.subr.bf16.mxu0 0
    %2346 = vmatpush1.bf16.msra.mxu0 %v2324
    %2347 = vmatprep.subr.bf16.mxu0 0
    %2348 = vmatpush1.bf16.msra.mxu0 %v2325
    %2349 = vmatprep.subr.bf16.mxu0 0
    %2350 = vmatpush1.bf16.msra.mxu0 %v2326
    %2351 = vmatprep.subr.bf16.mxu0 0
    %2352 = vmatpush1.bf16.msra.mxu0 0
    %2353 = vmatprep.subr.bf16.mxu0 0
    %2354 = vmatpush1.bf16.msra.mxu0 0
    %2355 = vmatprep.subr.bf16.mxu0 0
    %2356 = vmatpush1.bf16.msra.mxu0 0
    %2357 = vmatprep.subr.bf16.mxu0 0
    %2358 = vmatpush1.bf16.msra.mxu0 0
    %2359 = vmatprep.subr.bf16.mxu0 0
    %2360 = vmatpush1.bf16.msra.mxu0 0
    %2361 = vmatprep.subr.bf16.mxu0 0
    %2362 = vmatpush1.bf16.msra.mxu0 0
    %2363 = vmatprep.subr.bf16.mxu0 0
    %2364 = vmatpush1.bf16.msra.mxu0 0
    %2365 = vmatprep.subr.bf16.mxu0 0
    %2366 = vmatpush1.bf16.msra.mxu0 0
    %2367 = vmatprep.mubr.bf16.mxu0 0
    %2368 = vmatmul.mubr.bf16.gmra.mrb[0].mxu0 %v2263
    %v2369 = vpop.f32.mrb[0].mxu0
    %v2370 = vadd.f32 %v2285, %v2369
    %v2371 = vpop.f32.mrb[0].mxu0
    %v2372 = vpop.f32.mrb[0].mxu0
    %v2373 = vpop.f32.mrb[0].mxu0
    %2374 = vdwg.mxu0
    %v2375 = vmax.f32 %v2370, 0.0
    %v2376 = vpack.c.bf16 %v2375, %v2375
    %v2377 = vld [vmem:[%s9] sm:$0xf]
    %v2378 = vld [vmem:[%s9 + $0x4] sm:$0xf]
    %v2379 = vld [vmem:[%s9 + $0x8] sm:$0xf]
    %v2380 = vld [vmem:[%s9 + $0xc] sm:$0xf]
    %v2381 = vld [vmem:[%s9 + $0x10] sm:$0xf]
    %v2382 = vld [vmem:[%s9 + $0x14] sm:$0xf]
    %v2383 = vld [vmem:[%s9 + $0x18] sm:$0xf]
    %v2384 = vld [vmem:[%s9 + $0x1c] sm:$0xf]
    %v2385 = vld [vmem:[%s9 + $0x20] sm:$0xf]
    %v2386 = vld [vmem:[%s9 + $0x24] sm:$0xf]
    %v2387 = vld [vmem:[%s9 + $0x28] sm:$0xf]
    %v2388 = vld [vmem:[%s9 + $0x2c] sm:$0xf]
    %v2389 = vld [vmem:[%s9 + $0x30] sm:$0xf]
    %v2390 = vld [vmem:[%s9 + $0x34] sm:$0xf]
    %v2391 = vld [vmem:[%s9 + $0x38] sm:$0xf]
    %v2392 = vld [vmem:[%s9 + $0x3c] sm:$0xf]
    %v2393 = vld [vmem:[%s10] sm:$0x1]
    %v2395 = vlaneseq
    %v2396 = vshrl.u32 %v2395, 7
    %v2397 = vsub.s32 0, %v2396
    %v2398 = vrot.slane %v2393, %v2397
    %v2416 = vunpack.c.l.b16 %v2377
    %v2417 = vunpack.c.l.b16 %v2378
    %v2418 = vunpack.c.l.b16 %v2379
    %v2419 = vunpack.c.l.b16 %v2380
    %v2420 = vunpack.c.l.b16 %v2381
    %v2421 = vunpack.c.l.b16 %v2382
    %v2422 = vunpack.c.l.b16 %v2383
    %v2423 = vunpack.c.l.b16 %v2384
    %v2424 = vunpack.c.l.b16 %v2385
    %v2425 = vunpack.c.l.b16 %v2386
    %v2426 = vunpack.c.l.b16 %v2387
    %v2427 = vunpack.c.l.b16 %v2388
    %v2428 = vunpack.c.l.b16 %v2389
    %v2429 = vunpack.c.l.b16 %v2390
    %v2430 = vunpack.c.l.b16 %v2391
    %v2431 = vunpack.c.l.b16 %v2392
    %v2432 = vpack.c.b16 %v2417, %v2416
    %v2433 = vpack.c.b16 %v2419, %v2418
    %v2434 = vpack.c.b16 %v2421, %v2420
    %v2435 = vpack.c.b16 %v2423, %v2422
    %v2436 = vpack.c.b16 %v2425, %v2424
    %v2437 = vpack.c.b16 %v2427, %v2426
    %v2438 = vpack.c.b16 %v2429, %v2428
    %v2439 = vpack.c.b16 %v2431, %v2430
    %2448 = vmatprep.subr.bf16.mxu0 0
    %2449 = vmatpush1.bf16.msra.mxu0 %v2432
    %2450 = vmatprep.subr.bf16.mxu0 0
    %2451 = vmatpush1.bf16.msra.mxu0 %v2433
    %2452 = vmatprep.subr.bf16.mxu0 0
    %2453 = vmatpush1.bf16.msra.mxu0 %v2434
    %2454 = vmatprep.subr.bf16.mxu0 0
    %2455 = vmatpush1.bf16.msra.mxu0 %v2435
    %2456 = vmatprep.subr.bf16.mxu0 0
    %2457 = vmatpush1.bf16.msra.mxu0 %v2436
    %2458 = vmatprep.subr.bf16.mxu0 0
    %2459 = vmatpush1.bf16.msra.mxu0 %v2437
    %2460 = vmatprep.subr.bf16.mxu0 0
    %2461 = vmatpush1.bf16.msra.mxu0 %v2438
    %2462 = vmatprep.subr.bf16.mxu0 0
    %2463 = vmatpush1.bf16.msra.mxu0 %v2439
    %2464 = vmatprep.subr.bf16.mxu0 0
    %2465 = vmatpush1.bf16.msra.mxu0 0
    %2466 = vmatprep.subr.bf16.mxu0 0
    %2467 = vmatpush1.bf16.msra.mxu0 0
    %2468 = vmatprep.subr.bf16.mxu0 0
    %2469 = vmatpush1.bf16.msra.mxu0 0
    %2470 = vmatprep.subr.bf16.mxu0 0
    %2471 = vmatpush1.bf16.msra.mxu0 0
    %2472 = vmatprep.subr.bf16.mxu0 0
    %2473 = vmatpush1.bf16.msra.mxu0 0
    %2474 = vmatprep.subr.bf16.mxu0 0
    %2475 = vmatpush1.bf16.msra.mxu0 0
    %2476 = vmatprep.subr.bf16.mxu0 0
    %2477 = vmatpush1.bf16.msra.mxu0 0
    %2478 = vmatprep.subr.bf16.mxu0 0
    %2479 = vmatpush1.bf16.msra.mxu0 0
    %2480 = vmatprep.mubr.bf16.mxu0 0
    %2481 = vmatmul.mubr.bf16.gmra.mrb[0].mxu0 %v2376
    %v2482 = vpop.f32.mrb[0].mxu0
    %v2483 = vadd.f32 %v2398, %v2482
    %v2484 = vpop.f32.mrb[0].mxu0
    %v2485 = vpop.f32.mrb[0].mxu0
    %v2486 = vpop.f32.mrb[0].mxu0
    %2487 = vdwg.mxu0
    %v2488 = vpack.c.bf16 %v2483, %v2483
    %2489 = vst [vmem:[%s11] sm:$0xf] %v2488
    // Predicated region
    $region50: #{_net_forward_jit.1} parent=1 // pred_check
      _
    $region51: #{_net_forward_jit.1} parent=1 // pred_check_branch
      %2491 = sbr.rel (0) target = $region53
    $region52: #{_net_forward_jit.1} parent=1 // pred_region
      _
    $region53: #{_net_forward_jit.1} parent=1 // pred_fallthru
      _
    // Predicated region
    $region54: #{_net_forward_jit.1} parent=1 // pred_check
      _
    $region55: #{_net_forward_jit.1} parent=1 // pred_check_branch
      %2493 = sbr.rel (0) target = $region57
    $region56: #{_net_forward_jit.1} parent=1 // pred_region
      _
    $region57: #{_net_forward_jit.1} parent=1 // pred_fallthru
      _
    %2494 = vsyncpa [#allocation3], 1

</llo_original>
